<compile_context>
chip_gen: v7x
topology: tpu7x:2x2x1
jax: 0.10.0
libtpu: 0.0.40
codegen_flags: <defaults>
</compile_context>

<pallas_src>
import jax
import jax.numpy as jnp
from jax.experimental import pallas as pl
from jax.experimental.pallas import tpu as pltpu


# ----------------------------------------------------------------------------
# Kernel: one output row of Conv2d(k=3, s=2, p=1) + bias + ReLU.
#   xmain_ref : (2, Wo+1, 2*Cin) bf16  folded input rows for padded rows 2r, 2r+1
#               (folded: entry [cp, t*Cin+i] = x_pad[row, 2*cp + t, i])
#   xnext_ref : (Wo+1, 2*Cin)    bf16  folded row for padded row 2r+2 (1-row halo)
#   wpair_ref : (3, 2*Cin, Cout) bf16  taps (kh, kw=0|1) stacked on the contraction dim
#   wlast_ref : (3,   Cin, Cout) bf16  taps (kh, kw=2)
#   b_ref     : (1, Cout) f32
#   o_ref     : (Wo, Cout)             output row r
# ----------------------------------------------------------------------------
def _conv3x3_s2_kernel(xmain_ref, xnext_ref, wpair_ref, wlast_ref, b_ref, o_ref):
    wo, cout = o_ref.shape
    cin = wlast_ref.shape[1]
    rows = (xmain_ref[0], xmain_ref[1], xnext_ref[...])   # padded rows 2r, 2r+1, 2r+2
    acc = jnp.zeros((wo, cout), jnp.float32)
    for kh in range(3):                                   # unrolled: 6 small MXU dots
        row = rows[kh]                                    # (Wo+1, 2*Cin)
        pair = row[0:wo, :]                               # cols 2c, 2c+1   (kw = 0, 1)
        last = row[1:wo + 1, 0:cin]                       # col  2c+2       (kw = 2)
        acc = acc + jnp.dot(pair, wpair_ref[kh], preferred_element_type=jnp.float32)
        acc = acc + jnp.dot(last, wlast_ref[kh], preferred_element_type=jnp.float32)
    acc = acc + b_ref[...]
    o_ref[...] = jnp.maximum(acc, 0.0).astype(o_ref.dtype)


def conv3x3_s2_relu(x_nhwc, w, b, *, out_dtype=jnp.float32):
    """Fused-im2col Conv2d(k=3, s=2, p=1) + bias + ReLU.

    x: (N, H, W, Cin) float, w: (3, 3, Cin, Cout) f32, b: (Cout,) f32
    -> (N, Ho, Wo, Cout) out_dtype.
    """
    N, H, W, Cin = x_nhwc.shape
    Cout = w.shape[-1]
    Ho = (H + 2 - 3) // 2 + 1
    Wo = (W + 2 - 3) // 2 + 1
    Hp, Wp = 2 * Ho + 2, 2 * Wo + 2   # even extents; the extra pad row/col is never read

    # Single fused pass: cast -> bf16, zero-pad, and a layout-free "fold" reshape that
    # packs the stride-2 column pairs into the channel dim.  No im2col materialization.
    xpad = jnp.pad(x_nhwc.astype(jnp.bfloat16),
                   ((0, 0), (1, Hp - 1 - H), (1, Wp - 1 - W), (0, 0)))
    xf = xpad.reshape(N, Ho + 1, 2, Wo + 1, 2 * Cin)

    wpair = w[:, 0:2].reshape(3, 2 * Cin, Cout).astype(jnp.bfloat16)   # kw in {0, 1}
    wlast = w[:, 2].astype(jnp.bfloat16)                               # kw = 2
    bias = b.reshape(1, Cout).astype(jnp.float32)

    return pl.pallas_call(
        _conv3x3_s2_kernel,
        out_shape=jax.ShapeDtypeStruct((N, Ho, Wo, Cout), out_dtype),
        grid=(N, Ho),
        in_specs=[
            # folded row pair r (padded rows 2r, 2r+1): streamed, auto double-buffered
            pl.BlockSpec((None, None, 2, Wo + 1, 2 * Cin),
                         lambda n, h: (n, h, 0, 0, 0)),
            # folded row r+1, s=0 (padded row 2r+2): 1-row halo, streamed
            pl.BlockSpec((None, None, None, Wo + 1, 2 * Cin),
                         lambda n, h: (n, h + 1, 0, 0, 0)),
            # weights / bias: grid-constant index maps -> fetched once, stay resident
            pl.BlockSpec((3, 2 * Cin, Cout), lambda n, h: (0, 0, 0)),
            pl.BlockSpec((3, Cin, Cout), lambda n, h: (0, 0, 0)),
            pl.BlockSpec((1, Cout), lambda n, h: (0, 0)),
        ],
        # true Cout minor dim: no 128-pad junk columns, no post-call slice
        out_specs=pl.BlockSpec((None, None, Wo, Cout), lambda n, h: (n, h, 0, 0)),
        compiler_params=pltpu.CompilerParams(
            dimension_semantics=("parallel", "parallel"),
        ),
    )(xf, xf, wpair, wlast, bias)


# ----------------------------------------------------------------------------
# Nearest-neighbour mask resize == index gather (no kernel needed).
# Matches F.interpolate(m[None].float(), size=(Ho, Wo)).to(bool)[0]
# (legacy asymmetric 'nearest': src = floor(dst * in / out)).
# ----------------------------------------------------------------------------
def interpolate_mask_nearest(mask_bool, out_hw):
    N, H, W = mask_bool.shape
    Ho, Wo = out_hw
    src_h = (jnp.arange(Ho) * H) // Ho
    src_w = (jnp.arange(Wo) * W) // Wo
    return mask_bool[:, src_h][:, :, src_w]


# ----------------------------------------------------------------------------
# BackboneBase-equivalent forward
# ----------------------------------------------------------------------------
def init_backbone_params(key, cin, widths=(8, 16, 32)):
    # Synthetic 3-stage stride-2 backbone standing in for ResNet layer2/3/4.
    # TODO(synk): parameter freezing (requires_grad_) is training-only config; no forward effect.
    params = []
    c = cin
    for i, cout in enumerate(widths):
        kw, kb = jax.random.split(jax.random.fold_in(key, i))
        fan_in = 3 * 3 * c
        w = jax.random.normal(kw, (3, 3, c, cout), jnp.float32) * (2.0 / fan_in) ** 0.5
        b = jax.random.normal(kb, (cout,), jnp.float32) * 0.01
        params.append((w, b))
        c = cout
    return params


def backbone_base_forward(tensors_nchw, mask, params, return_interm_indices=(1, 2, 3)):
    """Equivalent of BackboneBase.forward on a NestedTensor (tensors, mask).

    Returns dict: str(layer_index) -> (features NCHW f32, mask (N, Ho, Wo) bool).
    Features are computed NHWC end-to-end; one NCHW transpose per returned stage at the
    output boundary (PyTorch convention).
    """
    n_ret = len(return_interm_indices)
    n_stages = len(params)
    x = jnp.transpose(tensors_nchw, (0, 2, 3, 1)).astype(jnp.float32)   # NCHW -> NHWC once
    feats = []
    for s, (w, b) in enumerate(params):
        returned = s >= n_stages - n_ret
        # Returned features stay f32 (reference convention); purely-internal stages chain
        # in bf16.  The next stage casts to bf16 inside its fused pad+fold pass anyway.
        x = conv3x3_s2_relu(x, w, b,
                            out_dtype=jnp.float32 if returned else jnp.bfloat16)
        feats.append(x)

    # IntermediateLayerGetter: last len(return_interm_indices) stages, keyed by str(idx).
    selected = feats[-n_ret:]
    out = {}
    for idx, f in zip(return_interm_indices, selected):
        f_nchw = jnp.transpose(f.astype(jnp.float32), (0, 3, 1, 2))     # layout only
        m = interpolate_mask_nearest(mask, f.shape[1:3])
        out[str(idx)] = (f_nchw, m)                                     # NestedTensor -> tuple
    return out


# Pure-JAX reference (same bf16-input / f32-accumulate numerics) for a sanity check.
def _conv_reference(x_nhwc, w, b):
    y = jax.lax.conv_general_dilated(
        x_nhwc.astype(jnp.bfloat16), w.astype(jnp.bfloat16),
        window_strides=(2, 2), padding=((1, 1), (1, 1)),
        dimension_numbers=("NHWC", "HWIO", "NHWC"),
        preferred_element_type=jnp.float32)
    return jnp.maximum(y + b.reshape(1, 1, 1, -1), 0.0)


if __name__ == "__main__":
    key = jax.random.PRNGKey(0)
    k_x, k_p = jax.random.split(key)

    N, C, H, W = 2, 4, 16, 16
    tensors = jax.random.normal(k_x, (N, C, H, W), jnp.float32)

    # Deterministic ragged padding mask (True = padded), DETR convention.
    col = jnp.arange(W)[None, None, :]
    row = jnp.arange(H)[None, :, None]
    valid_w = jnp.array([16, 12])[:, None, None]
    valid_h = jnp.array([16, 10])[:, None, None]
    mask = (col >= valid_w) | (row >= valid_h)                      # (N, H, W) bool

    params = init_backbone_params(k_p, cin=C, widths=(8, 16, 32))   # num_channels = 32

    fwd = jax.jit(backbone_base_forward, static_argnames=("return_interm_indices",))
    out = fwd(tensors, mask, params, return_interm_indices=(1, 2, 3))

    # Reference chain with matching per-stage bf16 casts.
    xr = jnp.transpose(tensors, (0, 2, 3, 1)).astype(jnp.float32)
    ref = {}
    for i, (w, b) in enumerate(params):
        xr = _conv_reference(xr, w, b)
        ref[str(i + 1)] = jnp.transpose(xr, (0, 3, 1, 2))

    for name, (feat, m) in out.items():
        jax.block_until_ready(feat)
        jax.block_until_ready(m)
        assert feat.dtype == jnp.float32 and m.dtype == jnp.bool_
        err = float(jnp.max(jnp.abs(feat - ref[name])))
        assert err < 5e-2, f"stage {name}: max abs err {err}"
    print("KERNEL_OK")
</pallas_src>

<mosaic_0001>
module attributes {stable_mosaic.version = 11 : i64} {
  func.func @_conv3x3_s2_kernel(%arg0: i32, %arg1: i32, %arg2: memref<1x1x2x9x8xbf16, #tpu.memory_space<vmem>>, %arg3: memref<1x1x1x9x8xbf16, #tpu.memory_space<vmem>>, %arg4: memref<3x8x8xbf16, #tpu.memory_space<vmem>>, %arg5: memref<3x4x8xbf16, #tpu.memory_space<vmem>>, %arg6: memref<1x8xf32, #tpu.memory_space<vmem>>, %arg7: memref<1x1x8x8xf32, #tpu.memory_space<vmem>>) attributes {dimension_semantics = [#tpu.dimension_semantics<parallel>, #tpu.dimension_semantics<parallel>], iteration_bounds = array<i64: 2, 8>, scalar_prefetch = 0 : i64, scratch_operands = 0 : i64, tpu.core_type = #tpu.core_type<tc>, window_params = [{transform_indices = @transform_0, window_bounds = array<i64: 1, 1, 2, 9, 8>}, {transform_indices = @transform_1, window_bounds = array<i64: 1, 1, 1, 9, 8>}, {pipeline_mode = #tpu.pipeline_mode<synchronous>, transform_indices = @transform_2, window_bounds = array<i64: 3, 8, 8>}, {pipeline_mode = #tpu.pipeline_mode<synchronous>, transform_indices = @transform_3, window_bounds = array<i64: 3, 4, 8>}, {pipeline_mode = #tpu.pipeline_mode<synchronous>, transform_indices = @transform_4, window_bounds = array<i64: 1, 8>}, {transform_indices = @transform_5, window_bounds = array<i64: 1, 1, 8, 8>}]} {
    %c0 = arith.constant 0 : index
    %c0_0 = arith.constant 0 : index
    %c0_1 = arith.constant 0 : index
    %c0_2 = arith.constant 0 : index
    %c0_3 = arith.constant 0 : index
    %0 = vector.load %arg2[%c0, %c0_0, %c0_1, %c0_2, %c0_3] : memref<1x1x2x9x8xbf16, #tpu.memory_space<vmem>>, vector<1x1x1x9x8xbf16>
    %1 = vector.shape_cast %0 : vector<1x1x1x9x8xbf16> to vector<9x8xbf16>
    %c0_4 = arith.constant 0 : index
    %c0_5 = arith.constant 0 : index
    %c1 = arith.constant 1 : index
    %c0_6 = arith.constant 0 : index
    %c0_7 = arith.constant 0 : index
    %2 = vector.load %arg2[%c0_4, %c0_5, %c1, %c0_6, %c0_7] : memref<1x1x2x9x8xbf16, #tpu.memory_space<vmem>>, vector<1x1x1x9x8xbf16>
    %3 = vector.shape_cast %2 : vector<1x1x1x9x8xbf16> to vector<9x8xbf16>
    %c0_8 = arith.constant 0 : index
    %c0_9 = arith.constant 0 : index
    %c0_10 = arith.constant 0 : index
    %c0_11 = arith.constant 0 : index
    %c0_12 = arith.constant 0 : index
    %4 = vector.load %arg3[%c0_8, %c0_9, %c0_10, %c0_11, %c0_12] : memref<1x1x1x9x8xbf16, #tpu.memory_space<vmem>>, vector<1x1x1x9x8xbf16>
    %5 = vector.shape_cast %4 : vector<1x1x1x9x8xbf16> to vector<9x8xbf16>
    %cst = arith.constant 0.000000e+00 : f32
    %6 = vector.broadcast %cst : f32 to vector<8x8xf32>
    %7 = vector.extract_strided_slice %1 {offsets = [0, 0], sizes = [8, 8], strides = [1, 1]} : vector<9x8xbf16> to vector<8x8xbf16>
    %8 = vector.extract_strided_slice %1 {offsets = [1, 0], sizes = [8, 4], strides = [1, 1]} : vector<9x8xbf16> to vector<8x4xbf16>
    %c0_13 = arith.constant 0 : index
    %c0_14 = arith.constant 0 : index
    %c0_15 = arith.constant 0 : index
    %9 = vector.load %arg4[%c0_13, %c0_14, %c0_15] : memref<3x8x8xbf16, #tpu.memory_space<vmem>>, vector<1x8x8xbf16>
    %10 = vector.shape_cast %9 : vector<1x8x8xbf16> to vector<8x8xbf16>
    %cst_16 = arith.constant dense<0.000000e+00> : vector<8x8xf32>
    %11 = tpu.matmul %7, %10, %cst_16 {dimension_numbers = #tpu.dot_dimension_numbers<[1], [0], [0], [1], [0, 0, 1, 1], [], []>} : vector<8x8xbf16>, vector<8x8xbf16>, vector<8x8xf32> -> vector<8x8xf32>
    %12 = arith.addf %6, %11 : vector<8x8xf32>
    %c0_17 = arith.constant 0 : index
    %c0_18 = arith.constant 0 : index
    %c0_19 = arith.constant 0 : index
    %13 = vector.load %arg5[%c0_17, %c0_18, %c0_19] : memref<3x4x8xbf16, #tpu.memory_space<vmem>>, vector<1x4x8xbf16>
    %14 = vector.shape_cast %13 : vector<1x4x8xbf16> to vector<4x8xbf16>
    %cst_20 = arith.constant dense<0.000000e+00> : vector<8x8xf32>
    %15 = tpu.matmul %8, %14, %cst_20 {dimension_numbers = #tpu.dot_dimension_numbers<[1], [0], [0], [1], [0, 0, 1, 1], [], []>} : vector<8x4xbf16>, vector<4x8xbf16>, vector<8x8xf32> -> vector<8x8xf32>
    %16 = arith.addf %12, %15 : vector<8x8xf32>
    %17 = vector.extract_strided_slice %3 {offsets = [0, 0], sizes = [8, 8], strides = [1, 1]} : vector<9x8xbf16> to vector<8x8xbf16>
    %18 = vector.extract_strided_slice %3 {offsets = [1, 0], sizes = [8, 4], strides = [1, 1]} : vector<9x8xbf16> to vector<8x4xbf16>
    %c1_21 = arith.constant 1 : index
    %c0_22 = arith.constant 0 : index
    %c0_23 = arith.constant 0 : index
    %19 = vector.load %arg4[%c1_21, %c0_22, %c0_23] : memref<3x8x8xbf16, #tpu.memory_space<vmem>>, vector<1x8x8xbf16>
    %20 = vector.shape_cast %19 : vector<1x8x8xbf16> to vector<8x8xbf16>
    %cst_24 = arith.constant dense<0.000000e+00> : vector<8x8xf32>
    %21 = tpu.matmul %17, %20, %cst_24 {dimension_numbers = #tpu.dot_dimension_numbers<[1], [0], [0], [1], [0, 0, 1, 1], [], []>} : vector<8x8xbf16>, vector<8x8xbf16>, vector<8x8xf32> -> vector<8x8xf32>
    %22 = arith.addf %16, %21 : vector<8x8xf32>
    %c1_25 = arith.constant 1 : index
    %c0_26 = arith.constant 0 : index
    %c0_27 = arith.constant 0 : index
    %23 = vector.load %arg5[%c1_25, %c0_26, %c0_27] : memref<3x4x8xbf16, #tpu.memory_space<vmem>>, vector<1x4x8xbf16>
    %24 = vector.shape_cast %23 : vector<1x4x8xbf16> to vector<4x8xbf16>
    %cst_28 = arith.constant dense<0.000000e+00> : vector<8x8xf32>
    %25 = tpu.matmul %18, %24, %cst_28 {dimension_numbers = #tpu.dot_dimension_numbers<[1], [0], [0], [1], [0, 0, 1, 1], [], []>} : vector<8x4xbf16>, vector<4x8xbf16>, vector<8x8xf32> -> vector<8x8xf32>
    %26 = arith.addf %22, %25 : vector<8x8xf32>
    %27 = vector.extract_strided_slice %5 {offsets = [0, 0], sizes = [8, 8], strides = [1, 1]} : vector<9x8xbf16> to vector<8x8xbf16>
    %28 = vector.extract_strided_slice %5 {offsets = [1, 0], sizes = [8, 4], strides = [1, 1]} : vector<9x8xbf16> to vector<8x4xbf16>
    %c2 = arith.constant 2 : index
    %c0_29 = arith.constant 0 : index
    %c0_30 = arith.constant 0 : index
    %29 = vector.load %arg4[%c2, %c0_29, %c0_30] : memref<3x8x8xbf16, #tpu.memory_space<vmem>>, vector<1x8x8xbf16>
    %30 = vector.shape_cast %29 : vector<1x8x8xbf16> to vector<8x8xbf16>
    %cst_31 = arith.constant dense<0.000000e+00> : vector<8x8xf32>
    %31 = tpu.matmul %27, %30, %cst_31 {dimension_numbers = #tpu.dot_dimension_numbers<[1], [0], [0], [1], [0, 0, 1, 1], [], []>} : vector<8x8xbf16>, vector<8x8xbf16>, vector<8x8xf32> -> vector<8x8xf32>
    %32 = arith.addf %26, %31 : vector<8x8xf32>
    %c2_32 = arith.constant 2 : index
    %c0_33 = arith.constant 0 : index
    %c0_34 = arith.constant 0 : index
    %33 = vector.load %arg5[%c2_32, %c0_33, %c0_34] : memref<3x4x8xbf16, #tpu.memory_space<vmem>>, vector<1x4x8xbf16>
    %34 = vector.shape_cast %33 : vector<1x4x8xbf16> to vector<4x8xbf16>
    %cst_35 = arith.constant dense<0.000000e+00> : vector<8x8xf32>
    %35 = tpu.matmul %28, %34, %cst_35 {dimension_numbers = #tpu.dot_dimension_numbers<[1], [0], [0], [1], [0, 0, 1, 1], [], []>} : vector<8x4xbf16>, vector<4x8xbf16>, vector<8x8xf32> -> vector<8x8xf32>
    %36 = arith.addf %32, %35 : vector<8x8xf32>
    %c0_36 = arith.constant 0 : index
    %c0_37 = arith.constant 0 : index
    %37 = vector.load %arg6[%c0_36, %c0_37] : memref<1x8xf32, #tpu.memory_space<vmem>>, vector<1x8xf32>
    %38 = vector.broadcast %37 : vector<1x8xf32> to vector<8x8xf32>
    %39 = arith.addf %36, %38 : vector<8x8xf32>
    %cst_38 = arith.constant 0.000000e+00 : f32
    %40 = vector.broadcast %cst_38 : f32 to vector<8x8xf32>
    %41 = arith.maximumf %39, %40 : vector<8x8xf32>
    %c0_39 = arith.constant 0 : index
    %c0_40 = arith.constant 0 : index
    %c0_41 = arith.constant 0 : index
    %c0_42 = arith.constant 0 : index
    %42 = vector.load %arg7[%c0_39, %c0_40, %c0_41, %c0_42] : memref<1x1x8x8xf32, #tpu.memory_space<vmem>>, vector<1x1x8x8xf32>
    %43 = vector.shape_cast %42 : vector<1x1x8x8xf32> to vector<8x8xf32>
    %44 = vector.shape_cast %41 : vector<8x8xf32> to vector<1x1x8x8xf32>
    tpu.vector_store %arg7[%c0_39, %c0_40, %c0_41, %c0_42], %44 {strides = array<i32>} : memref<1x1x8x8xf32, #tpu.memory_space<vmem>>, vector<1x1x8x8xf32>,
    return
  }
  func.func @transform_0(%arg0: i32, %arg1: i32) -> (i32, i32, i32, i32, i32) {
    %c0_i32 = arith.constant 0 : i32
    %c0_i32_0 = arith.constant 0 : i32
    %c0_i32_1 = arith.constant 0 : i32
    %c0_i32_2 = arith.constant 0 : i32
    return %arg0, %arg1, %c0_i32, %c0_i32_0, %c0_i32_1 : i32, i32, i32, i32, i32
  }
  func.func @transform_1(%arg0: i32, %arg1: i32) -> (i32, i32, i32, i32, i32) {
    %c1_i32 = arith.constant 1 : i32
    %0 = arith.addi %arg1, %c1_i32 : i32
    %c0_i32 = arith.constant 0 : i32
    %c0_i32_0 = arith.constant 0 : i32
    %c0_i32_1 = arith.constant 0 : i32
    %c0_i32_2 = arith.constant 0 : i32
    return %arg0, %0, %c0_i32, %c0_i32_0, %c0_i32_1 : i32, i32, i32, i32, i32
  }
  func.func @transform_2(%arg0: i32, %arg1: i32) -> (i32, i32, i32) {
    %c0_i32 = arith.constant 0 : i32
    %c0_i32_0 = arith.constant 0 : i32
    %c0_i32_1 = arith.constant 0 : i32
    %c0_i32_2 = arith.constant 0 : i32
    return %c0_i32, %c0_i32_0, %c0_i32_1 : i32, i32, i32
  }
  func.func @transform_3(%arg0: i32, %arg1: i32) -> (i32, i32, i32) {
    %c0_i32 = arith.constant 0 : i32
    %c0_i32_0 = arith.constant 0 : i32
    %c0_i32_1 = arith.constant 0 : i32
    %c0_i32_2 = arith.constant 0 : i32
    return %c0_i32, %c0_i32_0, %c0_i32_1 : i32, i32, i32
  }
  func.func @transform_4(%arg0: i32, %arg1: i32) -> (i32, i32) {
    %c0_i32 = arith.constant 0 : i32
    %c0_i32_0 = arith.constant 0 : i32
    %c0_i32_1 = arith.constant 0 : i32
    return %c0_i32, %c0_i32_0 : i32, i32
  }
  func.func @transform_5(%arg0: i32, %arg1: i32) -> (i32, i32, i32, i32) {
    %c0_i32 = arith.constant 0 : i32
    %c0_i32_0 = arith.constant 0 : i32
    %c0_i32_1 = arith.constant 0 : i32
    return %arg0, %arg1, %c0_i32, %c0_i32_0 : i32, i32, i32, i32
  }
}

module attributes {stable_mosaic.version = 11 : i64} {
  func.func @_conv3x3_s2_kernel(%arg0: i32, %arg1: i32, %arg2: memref<1x1x2x5x16xbf16, #tpu.memory_space<vmem>>, %arg3: memref<1x1x1x5x16xbf16, #tpu.memory_space<vmem>>, %arg4: memref<3x16x16xbf16, #tpu.memory_space<vmem>>, %arg5: memref<3x8x16xbf16, #tpu.memory_space<vmem>>, %arg6: memref<1x16xf32, #tpu.memory_space<vmem>>, %arg7: memref<1x1x4x16xf32, #tpu.memory_space<vmem>>) attributes {dimension_semantics = [#tpu.dimension_semantics<parallel>, #tpu.dimension_semantics<parallel>], iteration_bounds = array<i64: 2, 4>, scalar_prefetch = 0 : i64, scratch_operands = 0 : i64, tpu.core_type = #tpu.core_type<tc>, window_params = [{transform_indices = @transform_0, window_bounds = array<i64: 1, 1, 2, 5, 16>}, {transform_indices = @transform_1, window_bounds = array<i64: 1, 1, 1, 5, 16>}, {pipeline_mode = #tpu.pipeline_mode<synchronous>, transform_indices = @transform_2, window_bounds = array<i64: 3, 16, 16>}, {pipeline_mode = #tpu.pipeline_mode<synchronous>, transform_indices = @transform_3, window_bounds = array<i64: 3, 8, 16>}, {pipeline_mode = #tpu.pipeline_mode<synchronous>, transform_indices = @transform_4, window_bounds = array<i64: 1, 16>}, {transform_indices = @transform_5, window_bounds = array<i64: 1, 1, 4, 16>}]} {
    %c0 = arith.constant 0 : index
    %c0_0 = arith.constant 0 : index
    %c0_1 = arith.constant 0 : index
    %c0_2 = arith.constant 0 : index
    %c0_3 = arith.constant 0 : index
    %0 = vector.load %arg2[%c0, %c0_0, %c0_1, %c0_2, %c0_3] : memref<1x1x2x5x16xbf16, #tpu.memory_space<vmem>>, vector<1x1x1x5x16xbf16>
    %1 = vector.shape_cast %0 : vector<1x1x1x5x16xbf16> to vector<5x16xbf16>
    %c0_4 = arith.constant 0 : index
    %c0_5 = arith.constant 0 : index
    %c1 = arith.constant 1 : index
    %c0_6 = arith.constant 0 : index
    %c0_7 = arith.constant 0 : index
    %2 = vector.load %arg2[%c0_4, %c0_5, %c1, %c0_6, %c0_7] : memref<1x1x2x5x16xbf16, #tpu.memory_space<vmem>>, vector<1x1x1x5x16xbf16>
    %3 = vector.shape_cast %2 : vector<1x1x1x5x16xbf16> to vector<5x16xbf16>
    %c0_8 = arith.constant 0 : index
    %c0_9 = arith.constant 0 : index
    %c0_10 = arith.constant 0 : index
    %c0_11 = arith.constant 0 : index
    %c0_12 = arith.constant 0 : index
    %4 = vector.load %arg3[%c0_8, %c0_9, %c0_10, %c0_11, %c0_12] : memref<1x1x1x5x16xbf16, #tpu.memory_space<vmem>>, vector<1x1x1x5x16xbf16>
    %5 = vector.shape_cast %4 : vector<1x1x1x5x16xbf16> to vector<5x16xbf16>
    %cst = arith.constant 0.000000e+00 : f32
    %6 = vector.broadcast %cst : f32 to vector<4x16xf32>
    %7 = vector.extract_strided_slice %1 {offsets = [0, 0], sizes = [4, 16], strides = [1, 1]} : vector<5x16xbf16> to vector<4x16xbf16>
    %8 = vector.extract_strided_slice %1 {offsets = [1, 0], sizes = [4, 8], strides = [1, 1]} : vector<5x16xbf16> to vector<4x8xbf16>
    %c0_13 = arith.constant 0 : index
    %c0_14 = arith.constant 0 : index
    %c0_15 = arith.constant 0 : index
    %9 = vector.load %arg4[%c0_13, %c0_14, %c0_15] : memref<3x16x16xbf16, #tpu.memory_space<vmem>>, vector<1x16x16xbf16>
    %10 = vector.shape_cast %9 : vector<1x16x16xbf16> to vector<16x16xbf16>
    %cst_16 = arith.constant dense<0.000000e+00> : vector<4x16xf32>
    %11 = tpu.matmul %7, %10, %cst_16 {dimension_numbers = #tpu.dot_dimension_numbers<[1], [0], [0], [1], [0, 0, 1, 1], [], []>} : vector<4x16xbf16>, vector<16x16xbf16>, vector<4x16xf32> -> vector<4x16xf32>
    %12 = arith.addf %6, %11 : vector<4x16xf32>
    %c0_17 = arith.constant 0 : index
    %c0_18 = arith.constant 0 : index
    %c0_19 = arith.constant 0 : index
    %13 = vector.load %arg5[%c0_17, %c0_18, %c0_19] : memref<3x8x16xbf16, #tpu.memory_space<vmem>>, vector<1x8x16xbf16>
    %14 = vector.shape_cast %13 : vector<1x8x16xbf16> to vector<8x16xbf16>
    %cst_20 = arith.constant dense<0.000000e+00> : vector<4x16xf32>
    %15 = tpu.matmul %8, %14, %cst_20 {dimension_numbers = #tpu.dot_dimension_numbers<[1], [0], [0], [1], [0, 0, 1, 1], [], []>} : vector<4x8xbf16>, vector<8x16xbf16>, vector<4x16xf32> -> vector<4x16xf32>
    %16 = arith.addf %12, %15 : vector<4x16xf32>
    %17 = vector.extract_strided_slice %3 {offsets = [0, 0], sizes = [4, 16], strides = [1, 1]} : vector<5x16xbf16> to vector<4x16xbf16>
    %18 = vector.extract_strided_slice %3 {offsets = [1, 0], sizes = [4, 8], strides = [1, 1]} : vector<5x16xbf16> to vector<4x8xbf16>
    %c1_21 = arith.constant 1 : index
    %c0_22 = arith.constant 0 : index
    %c0_23 = arith.constant 0 : index
    %19 = vector.load %arg4[%c1_21, %c0_22, %c0_23] : memref<3x16x16xbf16, #tpu.memory_space<vmem>>, vector<1x16x16xbf16>
    %20 = vector.shape_cast %19 : vector<1x16x16xbf16> to vector<16x16xbf16>
    %cst_24 = arith.constant dense<0.000000e+00> : vector<4x16xf32>
    %21 = tpu.matmul %17, %20, %cst_24 {dimension_numbers = #tpu.dot_dimension_numbers<[1], [0], [0], [1], [0, 0, 1, 1], [], []>} : vector<4x16xbf16>, vector<16x16xbf16>, vector<4x16xf32> -> vector<4x16xf32>
    %22 = arith.addf %16, %21 : vector<4x16xf32>
    %c1_25 = arith.constant 1 : index
    %c0_26 = arith.constant 0 : index
    %c0_27 = arith.constant 0 : index
    %23 = vector.load %arg5[%c1_25, %c0_26, %c0_27] : memref<3x8x16xbf16, #tpu.memory_space<vmem>>, vector<1x8x16xbf16>
    %24 = vector.shape_cast %23 : vector<1x8x16xbf16> to vector<8x16xbf16>
    %cst_28 = arith.constant dense<0.000000e+00> : vector<4x16xf32>
    %25 = tpu.matmul %18, %24, %cst_28 {dimension_numbers = #tpu.dot_dimension_numbers<[1], [0], [0], [1], [0, 0, 1, 1], [], []>} : vector<4x8xbf16>, vector<8x16xbf16>, vector<4x16xf32> -> vector<4x16xf32>
    %26 = arith.addf %22, %25 : vector<4x16xf32>
    %27 = vector.extract_strided_slice %5 {offsets = [0, 0], sizes = [4, 16], strides = [1, 1]} : vector<5x16xbf16> to vector<4x16xbf16>
    %28 = vector.extract_strided_slice %5 {offsets = [1, 0], sizes = [4, 8], strides = [1, 1]} : vector<5x16xbf16> to vector<4x8xbf16>
    %c2 = arith.constant 2 : index
    %c0_29 = arith.constant 0 : index
    %c0_30 = arith.constant 0 : index
    %29 = vector.load %arg4[%c2, %c0_29, %c0_30] : memref<3x16x16xbf16, #tpu.memory_space<vmem>>, vector<1x16x16xbf16>
    %30 = vector.shape_cast %29 : vector<1x16x16xbf16> to vector<16x16xbf16>
    %cst_31 = arith.constant dense<0.000000e+00> : vector<4x16xf32>
    %31 = tpu.matmul %27, %30, %cst_31 {dimension_numbers = #tpu.dot_dimension_numbers<[1], [0], [0], [1], [0, 0, 1, 1], [], []>} : vector<4x16xbf16>, vector<16x16xbf16>, vector<4x16xf32> -> vector<4x16xf32>
    %32 = arith.addf %26, %31 : vector<4x16xf32>
    %c2_32 = arith.constant 2 : index
    %c0_33 = arith.constant 0 : index
    %c0_34 = arith.constant 0 : index
    %33 = vector.load %arg5[%c2_32, %c0_33, %c0_34] : memref<3x8x16xbf16, #tpu.memory_space<vmem>>, vector<1x8x16xbf16>
    %34 = vector.shape_cast %33 : vector<1x8x16xbf16> to vector<8x16xbf16>
    %cst_35 = arith.constant dense<0.000000e+00> : vector<4x16xf32>
    %35 = tpu.matmul %28, %34, %cst_35 {dimension_numbers = #tpu.dot_dimension_numbers<[1], [0], [0], [1], [0, 0, 1, 1], [], []>} : vector<4x8xbf16>, vector<8x16xbf16>, vector<4x16xf32> -> vector<4x16xf32>
    %36 = arith.addf %32, %35 : vector<4x16xf32>
    %c0_36 = arith.constant 0 : index
    %c0_37 = arith.constant 0 : index
    %37 = vector.load %arg6[%c0_36, %c0_37] : memref<1x16xf32, #tpu.memory_space<vmem>>, vector<1x16xf32>
    %38 = vector.broadcast %37 : vector<1x16xf32> to vector<4x16xf32>
    %39 = arith.addf %36, %38 : vector<4x16xf32>
    %cst_38 = arith.constant 0.000000e+00 : f32
    %40 = vector.broadcast %cst_38 : f32 to vector<4x16xf32>
    %41 = arith.maximumf %39, %40 : vector<4x16xf32>
    %c0_39 = arith.constant 0 : index
    %c0_40 = arith.constant 0 : index
    %c0_41 = arith.constant 0 : index
    %c0_42 = arith.constant 0 : index
    %42 = vector.load %arg7[%c0_39, %c0_40, %c0_41, %c0_42] : memref<1x1x4x16xf32, #tpu.memory_space<vmem>>, vector<1x1x4x16xf32>
    %43 = vector.shape_cast %42 : vector<1x1x4x16xf32> to vector<4x16xf32>
    %44 = vector.shape_cast %41 : vector<4x16xf32> to vector<1x1x4x16xf32>
    tpu.vector_store %arg7[%c0_39, %c0_40, %c0_41, %c0_42], %44 {strides = array<i32>} : memref<1x1x4x16xf32, #tpu.memory_space<vmem>>, vector<1x1x4x16xf32>,
    return
  }
  func.func @transform_0(%arg0: i32, %arg1: i32) -> (i32, i32, i32, i32, i32) {
    %c0_i32 = arith.constant 0 : i32
    %c0_i32_0 = arith.constant 0 : i32
    %c0_i32_1 = arith.constant 0 : i32
    %c0_i32_2 = arith.constant 0 : i32
    return %arg0, %arg1, %c0_i32, %c0_i32_0, %c0_i32_1 : i32, i32, i32, i32, i32
  }
  func.func @transform_1(%arg0: i32, %arg1: i32) -> (i32, i32, i32, i32, i32) {
    %c1_i32 = arith.constant 1 : i32
    %0 = arith.addi %arg1, %c1_i32 : i32
    %c0_i32 = arith.constant 0 : i32
    %c0_i32_0 = arith.constant 0 : i32
    %c0_i32_1 = arith.constant 0 : i32
    %c0_i32_2 = arith.constant 0 : i32
    return %arg0, %0, %c0_i32, %c0_i32_0, %c0_i32_1 : i32, i32, i32, i32, i32
  }
  func.func @transform_2(%arg0: i32, %arg1: i32) -> (i32, i32, i32) {
    %c0_i32 = arith.constant 0 : i32
    %c0_i32_0 = arith.constant 0 : i32
    %c0_i32_1 = arith.constant 0 : i32
    %c0_i32_2 = arith.constant 0 : i32
    return %c0_i32, %c0_i32_0, %c0_i32_1 : i32, i32, i32
  }
  func.func @transform_3(%arg0: i32, %arg1: i32) -> (i32, i32, i32) {
    %c0_i32 = arith.constant 0 : i32
    %c0_i32_0 = arith.constant 0 : i32
    %c0_i32_1 = arith.constant 0 : i32
    %c0_i32_2 = arith.constant 0 : i32
    return %c0_i32, %c0_i32_0, %c0_i32_1 : i32, i32, i32
  }
  func.func @transform_4(%arg0: i32, %arg1: i32) -> (i32, i32) {
    %c0_i32 = arith.constant 0 : i32
    %c0_i32_0 = arith.constant 0 : i32
    %c0_i32_1 = arith.constant 0 : i32
    return %c0_i32, %c0_i32_0 : i32, i32
  }
  func.func @transform_5(%arg0: i32, %arg1: i32) -> (i32, i32, i32, i32) {
    %c0_i32 = arith.constant 0 : i32
    %c0_i32_0 = arith.constant 0 : i32
    %c0_i32_1 = arith.constant 0 : i32
    return %arg0, %arg1, %c0_i32, %c0_i32_0 : i32, i32, i32, i32
  }
}

module attributes {stable_mosaic.version = 11 : i64} {
  func.func @_conv3x3_s2_kernel(%arg0: i32, %arg1: i32, %arg2: memref<1x1x2x3x32xbf16, #tpu.memory_space<vmem>>, %arg3: memref<1x1x1x3x32xbf16, #tpu.memory_space<vmem>>, %arg4: memref<3x32x32xbf16, #tpu.memory_space<vmem>>, %arg5: memref<3x16x32xbf16, #tpu.memory_space<vmem>>, %arg6: memref<1x32xf32, #tpu.memory_space<vmem>>, %arg7: memref<1x1x2x32xf32, #tpu.memory_space<vmem>>) attributes {dimension_semantics = [#tpu.dimension_semantics<parallel>, #tpu.dimension_semantics<parallel>], iteration_bounds = array<i64: 2, 2>, scalar_prefetch = 0 : i64, scratch_operands = 0 : i64, tpu.core_type = #tpu.core_type<tc>, window_params = [{transform_indices = @transform_0, window_bounds = array<i64: 1, 1, 2, 3, 32>}, {transform_indices = @transform_1, window_bounds = array<i64: 1, 1, 1, 3, 32>}, {pipeline_mode = #tpu.pipeline_mode<synchronous>, transform_indices = @transform_2, window_bounds = array<i64: 3, 32, 32>}, {pipeline_mode = #tpu.pipeline_mode<synchronous>, transform_indices = @transform_3, window_bounds = array<i64: 3, 16, 32>}, {pipeline_mode = #tpu.pipeline_mode<synchronous>, transform_indices = @transform_4, window_bounds = array<i64: 1, 32>}, {transform_indices = @transform_5, window_bounds = array<i64: 1, 1, 2, 32>}]} {
    %c0 = arith.constant 0 : index
    %c0_0 = arith.constant 0 : index
    %c0_1 = arith.constant 0 : index
    %c0_2 = arith.constant 0 : index
    %c0_3 = arith.constant 0 : index
    %0 = vector.load %arg2[%c0, %c0_0, %c0_1, %c0_2, %c0_3] : memref<1x1x2x3x32xbf16, #tpu.memory_space<vmem>>, vector<1x1x1x3x32xbf16>
    %1 = vector.shape_cast %0 : vector<1x1x1x3x32xbf16> to vector<3x32xbf16>
    %c0_4 = arith.constant 0 : index
    %c0_5 = arith.constant 0 : index
    %c1 = arith.constant 1 : index
    %c0_6 = arith.constant 0 : index
    %c0_7 = arith.constant 0 : index
    %2 = vector.load %arg2[%c0_4, %c0_5, %c1, %c0_6, %c0_7] : memref<1x1x2x3x32xbf16, #tpu.memory_space<vmem>>, vector<1x1x1x3x32xbf16>
    %3 = vector.shape_cast %2 : vector<1x1x1x3x32xbf16> to vector<3x32xbf16>
    %c0_8 = arith.constant 0 : index
    %c0_9 = arith.constant 0 : index
    %c0_10 = arith.constant 0 : index
    %c0_11 = arith.constant 0 : index
    %c0_12 = arith.constant 0 : index
    %4 = vector.load %arg3[%c0_8, %c0_9, %c0_10, %c0_11, %c0_12] : memref<1x1x1x3x32xbf16, #tpu.memory_space<vmem>>, vector<1x1x1x3x32xbf16>
    %5 = vector.shape_cast %4 : vector<1x1x1x3x32xbf16> to vector<3x32xbf16>
    %cst = arith.constant 0.000000e+00 : f32
    %6 = vector.broadcast %cst : f32 to vector<2x32xf32>
    %7 = vector.extract_strided_slice %1 {offsets = [0, 0], sizes = [2, 32], strides = [1, 1]} : vector<3x32xbf16> to vector<2x32xbf16>
    %8 = vector.extract_strided_slice %1 {offsets = [1, 0], sizes = [2, 16], strides = [1, 1]} : vector<3x32xbf16> to vector<2x16xbf16>
    %c0_13 = arith.constant 0 : index
    %c0_14 = arith.constant 0 : index
    %c0_15 = arith.constant 0 : index
    %9 = vector.load %arg4[%c0_13, %c0_14, %c0_15] : memref<3x32x32xbf16, #tpu.memory_space<vmem>>, vector<1x32x32xbf16>
    %10 = vector.shape_cast %9 : vector<1x32x32xbf16> to vector<32x32xbf16>
    %cst_16 = arith.constant dense<0.000000e+00> : vector<2x32xf32>
    %11 = tpu.matmul %7, %10, %cst_16 {dimension_numbers = #tpu.dot_dimension_numbers<[1], [0], [0], [1], [0, 0, 1, 1], [], []>} : vector<2x32xbf16>, vector<32x32xbf16>, vector<2x32xf32> -> vector<2x32xf32>
    %12 = arith.addf %6, %11 : vector<2x32xf32>
    %c0_17 = arith.constant 0 : index
    %c0_18 = arith.constant 0 : index
    %c0_19 = arith.constant 0 : index
    %13 = vector.load %arg5[%c0_17, %c0_18, %c0_19] : memref<3x16x32xbf16, #tpu.memory_space<vmem>>, vector<1x16x32xbf16>
    %14 = vector.shape_cast %13 : vector<1x16x32xbf16> to vector<16x32xbf16>
    %cst_20 = arith.constant dense<0.000000e+00> : vector<2x32xf32>
    %15 = tpu.matmul %8, %14, %cst_20 {dimension_numbers = #tpu.dot_dimension_numbers<[1], [0], [0], [1], [0, 0, 1, 1], [], []>} : vector<2x16xbf16>, vector<16x32xbf16>, vector<2x32xf32> -> vector<2x32xf32>
    %16 = arith.addf %12, %15 : vector<2x32xf32>
    %17 = vector.extract_strided_slice %3 {offsets = [0, 0], sizes = [2, 32], strides = [1, 1]} : vector<3x32xbf16> to vector<2x32xbf16>
    %18 = vector.extract_strided_slice %3 {offsets = [1, 0], sizes = [2, 16], strides = [1, 1]} : vector<3x32xbf16> to vector<2x16xbf16>
    %c1_21 = arith.constant 1 : index
    %c0_22 = arith.constant 0 : index
    %c0_23 = arith.constant 0 : index
    %19 = vector.load %arg4[%c1_21, %c0_22, %c0_23] : memref<3x32x32xbf16, #tpu.memory_space<vmem>>, vector<1x32x32xbf16>
    %20 = vector.shape_cast %19 : vector<1x32x32xbf16> to vector<32x32xbf16>
    %cst_24 = arith.constant dense<0.000000e+00> : vector<2x32xf32>
    %21 = tpu.matmul %17, %20, %cst_24 {dimension_numbers = #tpu.dot_dimension_numbers<[1], [0], [0], [1], [0, 0, 1, 1], [], []>} : vector<2x32xbf16>, vector<32x32xbf16>, vector<2x32xf32> -> vector<2x32xf32>
    %22 = arith.addf %16, %21 : vector<2x32xf32>
    %c1_25 = arith.constant 1 : index
    %c0_26 = arith.constant 0 : index
    %c0_27 = arith.constant 0 : index
    %23 = vector.load %arg5[%c1_25, %c0_26, %c0_27] : memref<3x16x32xbf16, #tpu.memory_space<vmem>>, vector<1x16x32xbf16>
    %24 = vector.shape_cast %23 : vector<1x16x32xbf16> to vector<16x32xbf16>
    %cst_28 = arith.constant dense<0.000000e+00> : vector<2x32xf32>
    %25 = tpu.matmul %18, %24, %cst_28 {dimension_numbers = #tpu.dot_dimension_numbers<[1], [0], [0], [1], [0, 0, 1, 1], [], []>} : vector<2x16xbf16>, vector<16x32xbf16>, vector<2x32xf32> -> vector<2x32xf32>
    %26 = arith.addf %22, %25 : vector<2x32xf32>
    %27 = vector.extract_strided_slice %5 {offsets = [0, 0], sizes = [2, 32], strides = [1, 1]} : vector<3x32xbf16> to vector<2x32xbf16>
    %28 = vector.extract_strided_slice %5 {offsets = [1, 0], sizes = [2, 16], strides = [1, 1]} : vector<3x32xbf16> to vector<2x16xbf16>
    %c2 = arith.constant 2 : index
    %c0_29 = arith.constant 0 : index
    %c0_30 = arith.constant 0 : index
    %29 = vector.load %arg4[%c2, %c0_29, %c0_30] : memref<3x32x32xbf16, #tpu.memory_space<vmem>>, vector<1x32x32xbf16>
    %30 = vector.shape_cast %29 : vector<1x32x32xbf16> to vector<32x32xbf16>
    %cst_31 = arith.constant dense<0.000000e+00> : vector<2x32xf32>
    %31 = tpu.matmul %27, %30, %cst_31 {dimension_numbers = #tpu.dot_dimension_numbers<[1], [0], [0], [1], [0, 0, 1, 1], [], []>} : vector<2x32xbf16>, vector<32x32xbf16>, vector<2x32xf32> -> vector<2x32xf32>
    %32 = arith.addf %26, %31 : vector<2x32xf32>
    %c2_32 = arith.constant 2 : index
    %c0_33 = arith.constant 0 : index
    %c0_34 = arith.constant 0 : index
    %33 = vector.load %arg5[%c2_32, %c0_33, %c0_34] : memref<3x16x32xbf16, #tpu.memory_space<vmem>>, vector<1x16x32xbf16>
    %34 = vector.shape_cast %33 : vector<1x16x32xbf16> to vector<16x32xbf16>
    %cst_35 = arith.constant dense<0.000000e+00> : vector<2x32xf32>
    %35 = tpu.matmul %28, %34, %cst_35 {dimension_numbers = #tpu.dot_dimension_numbers<[1], [0], [0], [1], [0, 0, 1, 1], [], []>} : vector<2x16xbf16>, vector<16x32xbf16>, vector<2x32xf32> -> vector<2x32xf32>
    %36 = arith.addf %32, %35 : vector<2x32xf32>
    %c0_36 = arith.constant 0 : index
    %c0_37 = arith.constant 0 : index
    %37 = vector.load %arg6[%c0_36, %c0_37] : memref<1x32xf32, #tpu.memory_space<vmem>>, vector<1x32xf32>
    %38 = vector.broadcast %37 : vector<1x32xf32> to vector<2x32xf32>
    %39 = arith.addf %36, %38 : vector<2x32xf32>
    %cst_38 = arith.constant 0.000000e+00 : f32
    %40 = vector.broadcast %cst_38 : f32 to vector<2x32xf32>
    %41 = arith.maximumf %39, %40 : vector<2x32xf32>
    %c0_39 = arith.constant 0 : index
    %c0_40 = arith.constant 0 : index
    %c0_41 = arith.constant 0 : index
    %c0_42 = arith.constant 0 : index
    %42 = vector.load %arg7[%c0_39, %c0_40, %c0_41, %c0_42] : memref<1x1x2x32xf32, #tpu.memory_space<vmem>>, vector<1x1x2x32xf32>
    %43 = vector.shape_cast %42 : vector<1x1x2x32xf32> to vector<2x32xf32>
    %44 = vector.shape_cast %41 : vector<2x32xf32> to vector<1x1x2x32xf32>
    tpu.vector_store %arg7[%c0_39, %c0_40, %c0_41, %c0_42], %44 {strides = array<i32>} : memref<1x1x2x32xf32, #tpu.memory_space<vmem>>, vector<1x1x2x32xf32>,
    return
  }
  func.func @transform_0(%arg0: i32, %arg1: i32) -> (i32, i32, i32, i32, i32) {
    %c0_i32 = arith.constant 0 : i32
    %c0_i32_0 = arith.constant 0 : i32
    %c0_i32_1 = arith.constant 0 : i32
    %c0_i32_2 = arith.constant 0 : i32
    return %arg0, %arg1, %c0_i32, %c0_i32_0, %c0_i32_1 : i32, i32, i32, i32, i32
  }
  func.func @transform_1(%arg0: i32, %arg1: i32) -> (i32, i32, i32, i32, i32) {
    %c1_i32 = arith.constant 1 : i32
    %0 = arith.addi %arg1, %c1_i32 : i32
    %c0_i32 = arith.constant 0 : i32
    %c0_i32_0 = arith.constant 0 : i32
    %c0_i32_1 = arith.constant 0 : i32
    %c0_i32_2 = arith.constant 0 : i32
    return %arg0, %0, %c0_i32, %c0_i32_0, %c0_i32_1 : i32, i32, i32, i32, i32
  }
  func.func @transform_2(%arg0: i32, %arg1: i32) -> (i32, i32, i32) {
    %c0_i32 = arith.constant 0 : i32
    %c0_i32_0 = arith.constant 0 : i32
    %c0_i32_1 = arith.constant 0 : i32
    %c0_i32_2 = arith.constant 0 : i32
    return %c0_i32, %c0_i32_0, %c0_i32_1 : i32, i32, i32
  }
  func.func @transform_3(%arg0: i32, %arg1: i32) -> (i32, i32, i32) {
    %c0_i32 = arith.constant 0 : i32
    %c0_i32_0 = arith.constant 0 : i32
    %c0_i32_1 = arith.constant 0 : i32
    %c0_i32_2 = arith.constant 0 : i32
    return %c0_i32, %c0_i32_0, %c0_i32_1 : i32, i32, i32
  }
  func.func @transform_4(%arg0: i32, %arg1: i32) -> (i32, i32) {
    %c0_i32 = arith.constant 0 : i32
    %c0_i32_0 = arith.constant 0 : i32
    %c0_i32_1 = arith.constant 0 : i32
    return %c0_i32, %c0_i32_0 : i32, i32
  }
  func.func @transform_5(%arg0: i32, %arg1: i32) -> (i32, i32, i32, i32) {
    %c0_i32 = arith.constant 0 : i32
    %c0_i32_0 = arith.constant 0 : i32
    %c0_i32_1 = arith.constant 0 : i32
    return %arg0, %arg1, %c0_i32, %c0_i32_0 : i32, i32, i32, i32
  }
}

</mosaic_0001>

<llo_original>
// kernel: backbone_base_forward.3
$region0: #{backbone_base_forward.3}
  #allocation0 [shape = 'u32[]', space=smem, size = 0x4, offset = 0x4, fixed_abs, tag = 'smem constant byte address 0x4 - core index']
  #allocation1 [shape = 'u32[144,128]{1,0:T(1,128)}', space=vmem, size = 0x12000, scoped, tag = 'internal scratch']
  %s0 = inlined_call_operand.vmem [shape: bf16[2,9,2,9,8], index: 0, kind: input, shape index: {}, may-alias: {0,1}]
  %s1 = inlined_call_operand.vmem [shape: bf16[2,9,2,9,8], index: 1, kind: input, shape index: {}, may-alias: {0,1}]
  %s2 = inlined_call_operand.vmem [shape: bf16[3,8,8], index: 2, kind: input, shape index: {}]
  %s3 = inlined_call_operand.vmem [shape: bf16[3,4,8], index: 3, kind: input, shape index: {}]
  %s4 = inlined_call_operand.vmem [shape: f32[1,8], index: 4, kind: input, shape index: {}]
  %s5 = inlined_call_operand.vmem [shape: f32[2,8,8,8], index: 5, kind: output, shape index: {}]
  %s6 = sld [smem:[#allocation0]]
  $region53: #{backbone_base_forward.3} parent=0
    _
  %s8 = ssub.s32 1, %s6
  %s9 = scalar_select 0, %s8, %s6
  loop: start=0, step=1, limit=18
  $region2: #{backbone_base_forward.3} parent=0 // loop_pre_header
    _
  $region3: #{backbone_base_forward.3} parent=0 // loop_header
    %s11 = sphi 0, %s15
    %p12 = scmp.ge.s32.totalorder %s11, 18
    %s18 = sphi 0, %s30
    %s19 = sphi 0, %s26
    %s20 = sphi 0, %s18
    %s21 = sphi 0, %s19
    %s22 = sphi 0, %s20
    %s23 = sphi 0, %s21
    %s35 = sphi 0, %s37
    %s38 = sphi 0, %s35
    %s39 = sphi 0, %s38
    %s55 = sphi 0, %s39
    %s65 = sphi 0, %s67
    %s68 = sphi 0, %s65
    %s69 = sphi 0, %s68
    %s85 = sphi 0, %s69
    %s89 = sphi 0, %s89
    %s91 = sphi 0, %s89
    %s92 = sphi 0, %s91
    %s106 = sphi 0, %s92
    %s110 = sphi 0, %s110
    %s112 = sphi 0, %s110
    %s113 = sphi 0, %s112
    %s127 = sphi 0, %s113
    %s131 = sphi 0, %s131
    %s133 = sphi 0, %s131
    %s134 = sphi 0, %s133
    %s148 = sphi 0, %s134
    %s156 = sphi 0, %s158
    %s159 = sphi 0, %s156
    %s160 = sphi 0, %s159
    %s176 = sphi 0, %s160
  $region4: #{backbone_base_forward.3} parent=0 // loop_header_branch
    %14 = sbr.rel (%p12) target = $region8
  $region5: #{backbone_base_forward.3} parent=0 // loop_body
    %s16 = ssub.s32 %s11, 1
    %s17 = ssub.s32 %s11, 2
    %s24 = sadd.s32 1, %s19
    %p25 = scmp.ge.s32.totalorder %s24, 8
    %s26 = scalar_select %p25, 0, %s24
    %s27 = sadd.s32 1, %s18
    %s28 = scalar_select %p25, %s27, %s18
    %p29 = scmp.ge.s32.totalorder %s28, 2
    %s30 = scalar_select %p29, 0, %s28
    %s31 = ssub.s32 %s18, %s30
    %s32 = ssub.s32 %s19, %s26
    %s33 = sor.u32 %s31, %s32
    %p34 = scmp.eq.s32.totalorder %s33, 0
    %s36 = sadd.s32 %s35, 1
    %s37 = scalar_select %p34, %s35, %s36
    %p40 = pneg %p34
    %p41 = scmp.eq.s32.totalorder %s11, 15
    %p42 = por %p40, %p41
    %p43 = scmp.ne.s32.totalorder %s35, %s38
    %p44 = scmp.eq.s32.totalorder %s11, 0
    %p45 = por %p43, %p44
    %p46 = scmp.ne.s32.totalorder %s35, %s38
    %p47 = scmp.eq.s32.totalorder %s16, 15
    %p48 = por %p46, %p47
    %p49 = scmp.ne.s32.totalorder %s38, %s39
    %p50 = scmp.eq.s32.totalorder %s16, 0
    %p51 = por %p49, %p50
    %p52 = scmp.ne.s32.totalorder %s38, %s39
    %p53 = scmp.eq.s32.totalorder %s17, 15
    %p54 = por %p52, %p53
    %p56 = scmp.ne.s32.totalorder %s39, %s55
    %p57 = scmp.eq.s32.totalorder %s17, 0
    %p58 = por %p56, %p57
    %s59 = sadd.s32 %s19, 1
    %s60 = sadd.s32 %s26, 1
    %s61 = ssub.s32 %s18, %s30
    %s62 = ssub.s32 %s59, %s60
    %s63 = sor.u32 %s61, %s62
    %p64 = scmp.eq.s32.totalorder %s63, 0
    %s66 = sadd.s32 %s65, 1
    %s67 = scalar_select %p64, %s65, %s66
    %p70 = pneg %p64
    %p71 = scmp.eq.s32.totalorder %s11, 15
    %p72 = por %p70, %p71
    %p73 = scmp.ne.s32.totalorder %s65, %s68
    %p74 = scmp.eq.s32.totalorder %s11, 0
    %p75 = por %p73, %p74
    %p76 = scmp.ne.s32.totalorder %s65, %s68
    %p77 = scmp.eq.s32.totalorder %s16, 15
    %p78 = por %p76, %p77
    %p79 = scmp.ne.s32.totalorder %s68, %s69
    %p80 = scmp.eq.s32.totalorder %s16, 0
    %p81 = por %p79, %p80
    %p82 = scmp.ne.s32.totalorder %s68, %s69
    %p83 = scmp.eq.s32.totalorder %s17, 15
    %p84 = por %p82, %p83
    %p86 = scmp.ne.s32.totalorder %s69, %s85
    %p87 = scmp.eq.s32.totalorder %s17, 0
    %p88 = por %p86, %p87
    %s90 = sadd.s32 %s89, 1
    %p93 = scmp.eq.s32.totalorder %s11, 15
    %p94 = scmp.ne.s32.totalorder %s89, %s91
    %p95 = scmp.eq.s32.totalorder %s11, 0
    %p96 = por %p94, %p95
    %p97 = scmp.ne.s32.totalorder %s89, %s91
    %p98 = scmp.eq.s32.totalorder %s16, 15
    %p99 = por %p97, %p98
    %p100 = scmp.ne.s32.totalorder %s91, %s92
    %p101 = scmp.eq.s32.totalorder %s16, 0
    %p102 = por %p100, %p101
    %p103 = scmp.ne.s32.totalorder %s91, %s92
    %p104 = scmp.eq.s32.totalorder %s17, 15
    %p105 = por %p103, %p104
    %p107 = scmp.ne.s32.totalorder %s92, %s106
    %p108 = scmp.eq.s32.totalorder %s17, 0
    %p109 = por %p107, %p108
    %s111 = sadd.s32 %s110, 1
    %p114 = scmp.eq.s32.totalorder %s11, 15
    %p115 = scmp.ne.s32.totalorder %s110, %s112
    %p116 = scmp.eq.s32.totalorder %s11, 0
    %p117 = por %p115, %p116
    %p118 = scmp.ne.s32.totalorder %s110, %s112
    %p119 = scmp.eq.s32.totalorder %s16, 15
    %p120 = por %p118, %p119
    %p121 = scmp.ne.s32.totalorder %s112, %s113
    %p122 = scmp.eq.s32.totalorder %s16, 0
    %p123 = por %p121, %p122
    %p124 = scmp.ne.s32.totalorder %s112, %s113
    %p125 = scmp.eq.s32.totalorder %s17, 15
    %p126 = por %p124, %p125
    %p128 = scmp.ne.s32.totalorder %s113, %s127
    %p129 = scmp.eq.s32.totalorder %s17, 0
    %p130 = por %p128, %p129
    %s132 = sadd.s32 %s131, 1
    %p135 = scmp.eq.s32.totalorder %s11, 15
    %p136 = scmp.ne.s32.totalorder %s131, %s133
    %p137 = scmp.eq.s32.totalorder %s11, 0
    %p138 = por %p136, %p137
    %p139 = scmp.ne.s32.totalorder %s131, %s133
    %p140 = scmp.eq.s32.totalorder %s16, 15
    %p141 = por %p139, %p140
    %p142 = scmp.ne.s32.totalorder %s133, %s134
    %p143 = scmp.eq.s32.totalorder %s16, 0
    %p144 = por %p142, %p143
    %p145 = scmp.ne.s32.totalorder %s133, %s134
    %p146 = scmp.eq.s32.totalorder %s17, 15
    %p147 = por %p145, %p146
    %p149 = scmp.ne.s32.totalorder %s134, %s148
    %p150 = scmp.eq.s32.totalorder %s17, 0
    %p151 = por %p149, %p150
    %s152 = ssub.s32 %s18, %s30
    %s153 = ssub.s32 %s19, %s26
    %s154 = sor.u32 %s152, %s153
    %p155 = scmp.eq.s32.totalorder %s154, 0
    %s157 = sadd.s32 %s156, 1
    %s158 = scalar_select %p155, %s156, %s157
    %p161 = pneg %p155
    %p162 = scmp.eq.s32.totalorder %s11, 15
    %p163 = por %p161, %p162
    %p164 = scmp.ne.s32.totalorder %s156, %s159
    %p165 = scmp.eq.s32.totalorder %s11, 0
    %p166 = por %p164, %p165
    %p167 = scmp.ne.s32.totalorder %s156, %s159
    %p168 = scmp.eq.s32.totalorder %s16, 15
    %p169 = por %p167, %p168
    %p170 = scmp.ne.s32.totalorder %s159, %s160
    %p171 = scmp.eq.s32.totalorder %s16, 0
    %p172 = por %p170, %p171
    %p173 = scmp.ne.s32.totalorder %s159, %s160
    %p174 = scmp.eq.s32.totalorder %s17, 15
    %p175 = por %p173, %p174
    %p177 = scmp.ne.s32.totalorder %s160, %s176
    %p178 = scmp.eq.s32.totalorder %s17, 0
    %p179 = por %p177, %p178
    %p180 = scmp.le.s32.totalorder 1, %s11
    %p181 = scmp.lt.s32.totalorder %s11, 17
    %p182 = pnand %p180, %p181
    %p183 = pneg %p182
    // Predicated region
    $region9: #{backbone_base_forward.3} parent=5 // pred_check
      _
    $region10: #{backbone_base_forward.3} parent=5 // pred_check_branch
      %185 = sbr.rel (%p182) target = $region12
    $region11: #{backbone_base_forward.3} parent=5 // pred_region
      %s186 = ssub.s32 %s11, 1
      // Predicated region
      $region13: #{backbone_base_forward.3} parent=11 // pred_check
        %p187 = pneg %p102
      $region14: #{backbone_base_forward.3} parent=11 // pred_check_branch
        %189 = sbr.rel (%p187) target = $region16
      $region15: #{backbone_base_forward.3} parent=11 // pred_region
        _
      $region16: #{backbone_base_forward.3} parent=11 // pred_fallthru
        _
      // Predicated region
      $region17: #{backbone_base_forward.3} parent=11 // pred_check
        %p190 = pneg %p123
      $region18: #{backbone_base_forward.3} parent=11 // pred_check_branch
        %192 = sbr.rel (%p190) target = $region20
      $region19: #{backbone_base_forward.3} parent=11 // pred_region
        _
      $region20: #{backbone_base_forward.3} parent=11 // pred_fallthru
        _
      // Predicated region
      $region21: #{backbone_base_forward.3} parent=11 // pred_check
        %p193 = pneg %p144
      $region22: #{backbone_base_forward.3} parent=11 // pred_check_branch
        %195 = sbr.rel (%p193) target = $region24
      $region23: #{backbone_base_forward.3} parent=11 // pred_region
        _
      $region24: #{backbone_base_forward.3} parent=11 // pred_fallthru
        _
    $region12: #{backbone_base_forward.3} parent=5 // pred_fallthru
      _
    %p196 = scmp.lt.s32.totalorder %s11, 16
    // Predicated region
    $region25: #{backbone_base_forward.3} parent=5 // pred_check
      %p197 = pneg %p196
    $region26: #{backbone_base_forward.3} parent=5 // pred_check_branch
      %199 = sbr.rel (%p197) target = $region28
    $region27: #{backbone_base_forward.3} parent=5 // pred_region
      // Predicated region
      $region29: #{backbone_base_forward.3} parent=27 // pred_check
        %p200 = pneg %p45
      $region30: #{backbone_base_forward.3} parent=27 // pred_check_branch
        %202 = sbr.rel (%p200) target = $region32
      $region31: #{backbone_base_forward.3} parent=27 // pred_region
        %p203 = scmp.lt.s32.totalorder %s18, 1
        %s204 = scalar_select %p203, %s18, 1
        %p205 = scmp.lt.s32.totalorder %s19, 8
        %s206 = scalar_select %p205, %s19, 8
        %s207 = smul.addr %s206, 4
        %s208 = smul.addr %s204, 36
        %s209 = sadd.s32 %s207, %s208
        %s210 = smul.addr %s209, 4
        %s211 = scalar_lea.vmem %s0, %s210
      $region32: #{backbone_base_forward.3} parent=27 // pred_fallthru
        _
      // Predicated region
      $region33: #{backbone_base_forward.3} parent=27 // pred_check
        %p212 = pneg %p75
      $region34: #{backbone_base_forward.3} parent=27 // pred_check_branch
        %214 = sbr.rel (%p212) target = $region36
      $region35: #{backbone_base_forward.3} parent=27 // pred_region
        %s215 = sadd.s32 %s19, 1
        %p216 = scmp.lt.s32.totalorder %s18, 1
        %s217 = scalar_select %p216, %s18, 1
        %p218 = scmp.lt.s32.totalorder %s215, 8
        %s219 = scalar_select %p218, %s215, 8
        %s220 = smul.addr %s219, 4
        %s221 = smul.addr %s217, 36
        %s222 = sadd.s32 %s220, %s221
        %s223 = smul.addr %s222, 4
        %s224 = scalar_lea.vmem %s1, %s223
        %s225 = sadd.s32 %s19, 1
      $region36: #{backbone_base_forward.3} parent=27 // pred_fallthru
        _
    $region28: #{backbone_base_forward.3} parent=5 // pred_fallthru
      _
    %p226 = scmp.le.s32.totalorder 1, %s11
    %p227 = scmp.lt.s32.totalorder %s11, 17
    %p228 = pnand %p226, %p227
    %p229 = pneg %p228
    // Predicated region
    $region37: #{backbone_base_forward.3} parent=5 // pred_check
      _
    $region38: #{backbone_base_forward.3} parent=5 // pred_check_branch
      %231 = sbr.rel (%p228) target = $region40
    $region39: #{backbone_base_forward.3} parent=5 // pred_region
      %s232 = ssub.s32 %s11, 1
      %p233 = scmp.lt.s32.totalorder %s20, 1
      %s234 = scalar_select %p233, %s20, 1
      %p235 = scmp.lt.s32.totalorder %s21, 8
      %s236 = scalar_select %p235, %s21, 8
      %s237 = smul.addr %s236, 4
      %s238 = smul.addr %s234, 36
      %s239 = sadd.s32 %s237, %s238
      %s240 = smul.addr %s239, 4
      %s241 = scalar_lea.vmem %s0, %s240
      %p242 = pneg %p51
      %p243 = pneg %p48
      %s244 = sadd.s32 %s21, 1
      %p245 = scmp.lt.s32.totalorder %s20, 1
      %s246 = scalar_select %p245, %s20, 1
      %p247 = scmp.lt.s32.totalorder %s244, 8
      %s248 = scalar_select %p247, %s244, 8
      %s249 = smul.addr %s248, 4
      %s250 = smul.addr %s246, 36
      %s251 = sadd.s32 %s249, %s250
      %s252 = smul.addr %s251, 4
      %s253 = scalar_lea.vmem %s1, %s252
      %p254 = pneg %p81
      %p255 = pneg %p78
      %p256 = pneg %p102
      %p257 = pneg %p99
      %p258 = pneg %p123
      %p259 = pneg %p120
      %p260 = pneg %p144
      %p261 = pneg %p141
      %p262 = pneg %p172
      %p263 = pneg %p169
      %p264 = scmp.lt.s32.totalorder %s20, 1
      %s265 = scalar_select %p264, %s20, 1
      %p266 = scmp.lt.s32.totalorder %s21, 7
      %s267 = scalar_select %p266, %s21, 7
      %s268 = smul.addr %s265, 8
      %s269 = sadd.s32 %s267, %s268
      %s270 = smul.addr %s269, 8
      %s271 = scalar_lea.vmem %s5, %s270
      %p272 = scmp.lt.s32.totalorder %s20, 1
      %s273 = scalar_select %p272, %s20, 1
      %p274 = scmp.lt.s32.totalorder %s21, 8
      %s275 = scalar_select %p274, %s21, 8
      %s276 = smul.addr %s275, 4
      %s277 = smul.addr %s273, 36
      %s278 = sadd.s32 %s276, %s277
      %s279 = smul.addr %s278, 4
      %s280 = scalar_lea.vmem %s0, %s279
      %s281 = sadd.s32 %s21, 1
      %p282 = scmp.lt.s32.totalorder %s20, 1
      %s283 = scalar_select %p282, %s20, 1
      %p284 = scmp.lt.s32.totalorder %s281, 8
      %s285 = scalar_select %p284, %s281, 8
      %s286 = smul.addr %s285, 4
      %s287 = smul.addr %s283, 36
      %s288 = sadd.s32 %s286, %s287
      %s289 = smul.addr %s288, 4
      %s290 = scalar_lea.vmem %s1, %s289
      %s291 = sadd.s32 %s21, 1
      %p292 = scmp.lt.s32.totalorder %s20, 1
      %s293 = scalar_select %p292, %s20, 1
      %p294 = scmp.lt.s32.totalorder %s21, 7
      %s295 = scalar_select %p294, %s21, 7
      %s296 = smul.addr %s293, 8
      %s297 = sadd.s32 %s295, %s296
      %s298 = smul.addr %s297, 8
      %s299 = scalar_lea.vmem %s5, %s298
      %v301 = vld [vmem:[%s280] sm:$0xf]
      %v302 = vld [vmem:[%s280 + $0x4] sm:$0x1]
      %s303 = scalar_lea.vmem %s280, 8
      %v304 = vld [vmem:[%s303] sm:$0xf]
      %v305 = vld [vmem:[%s303 + $0x4] sm:$0x1]
      %v306 = vld [vmem:[%s290] sm:$0xf]
      %v307 = vld [vmem:[%s290 + $0x4] sm:$0x1]
      %v308 = vld [vmem:[%s2] sm:$0xf]
      %v309 = vld [vmem:[%s3] sm:$0x3]
      %v312 = vunpack.c.l.b16 %v301
      %v313 = vunpack.c.l.b16 %v302
      %v314 = vpack.c.b16 %v313, %v312
      %v316 = vshrl.u32 %v314, 16
      %v318 = vshll.u32 %v314, 16
      %v320 = vrot.slane %v318, 1
      %v321 = vor.u32 %v316, %v320
      %vm322 = vcmask 31744
      %v324 = vsel %vm322, %v321, 0
      %vm326 = vcmask 1041408
      %v328 = vsel %vm326, %v309, 0
      %330 = vmatprep.subr.bf16.mxu0 0
      %331 = vmatpush1.bf16.msra.mxu0 %v328
      %332 = vmatprep.subr.bf16.mxu0 0
      %333 = vmatpush1.bf16.msra.mxu0 0
      %334 = vmatprep.subr.bf16.mxu0 0
      %335 = vmatpush1.bf16.msra.mxu0 0
      %336 = vmatprep.subr.bf16.mxu0 0
      %337 = vmatpush1.bf16.msra.mxu0 0
      %338 = vmatprep.subr.bf16.mxu0 0
      %339 = vmatpush1.bf16.msra.mxu0 0
      %340 = vmatprep.subr.bf16.mxu0 0
      %341 = vmatpush1.bf16.msra.mxu0 0
      %342 = vmatprep.subr.bf16.mxu0 0
      %343 = vmatpush1.bf16.msra.mxu0 0
      %344 = vmatprep.subr.bf16.mxu0 0
      %345 = vmatpush1.bf16.msra.mxu0 0
      %346 = vmatprep.subr.bf16.mxu0 0
      %347 = vmatpush1.bf16.msra.mxu0 0
      %348 = vmatprep.subr.bf16.mxu0 0
      %349 = vmatpush1.bf16.msra.mxu0 0
      %350 = vmatprep.subr.bf16.mxu0 0
      %351 = vmatpush1.bf16.msra.mxu0 0
      %352 = vmatprep.subr.bf16.mxu0 0
      %353 = vmatpush1.bf16.msra.mxu0 0
      %354 = vmatprep.subr.bf16.mxu0 0
      %355 = vmatpush1.bf16.msra.mxu0 0
      %356 = vmatprep.subr.bf16.mxu0 0
      %357 = vmatpush1.bf16.msra.mxu0 0
      %358 = vmatprep.subr.bf16.mxu0 0
      %359 = vmatpush1.bf16.msra.mxu0 0
      %360 = vmatprep.subr.bf16.mxu0 0
      %361 = vmatpush1.bf16.msra.mxu0 0
      %362 = vmatprep.mubr.bf16.mxu0 0
      %363 = vmatmul.mubr.bf16.gmra.mrb[0].mxu0 %v324
      %v364 = vpop.f32.mrb[0].mxu0
      %v365 = vadd.f32 0.0, %v364
      %v366 = vpop.f32.mrb[0].mxu0
      %v367 = vpop.f32.mrb[0].mxu0
      %v368 = vpop.f32.mrb[0].mxu0
      %369 = vdwg.mxu0
      %vm370 = vcmask 64512
      %v372 = vsel %vm370, %v301, 0
      %vm374 = vcmask 1043456
      %v376 = vsel %vm374, %v308, 0
      %378 = vmatprep.subr.bf16.mxu0 0
      %379 = vmatpush1.bf16.msra.mxu0 %v376
      %380 = vmatprep.subr.bf16.mxu0 0
      %381 = vmatpush1.bf16.msra.mxu0 0
      %382 = vmatprep.subr.bf16.mxu0 0
      %383 = vmatpush1.bf16.msra.mxu0 0
      %384 = vmatprep.subr.bf16.mxu0 0
      %385 = vmatpush1.bf16.msra.mxu0 0
      %386 = vmatprep.subr.bf16.mxu0 0
      %387 = vmatpush1.bf16.msra.mxu0 0
      %388 = vmatprep.subr.bf16.mxu0 0
      %389 = vmatpush1.bf16.msra.mxu0 0
      %390 = vmatprep.subr.bf16.mxu0 0
      %391 = vmatpush1.bf16.msra.mxu0 0
      %392 = vmatprep.subr.bf16.mxu0 0
      %393 = vmatpush1.bf16.msra.mxu0 0
      %394 = vmatprep.subr.bf16.mxu0 0
      %395 = vmatpush1.bf16.msra.mxu0 0
      %396 = vmatprep.subr.bf16.mxu0 0
      %397 = vmatpush1.bf16.msra.mxu0 0
      %398 = vmatprep.subr.bf16.mxu0 0
      %399 = vmatpush1.bf16.msra.mxu0 0
      %400 = vmatprep.subr.bf16.mxu0 0
      %401 = vmatpush1.bf16.msra.mxu0 0
      %402 = vmatprep.subr.bf16.mxu0 0
      %403 = vmatpush1.bf16.msra.mxu0 0
      %404 = vmatprep.subr.bf16.mxu0 0
      %405 = vmatpush1.bf16.msra.mxu0 0
      %406 = vmatprep.subr.bf16.mxu0 0
      %407 = vmatpush1.bf16.msra.mxu0 0
      %408 = vmatprep.subr.bf16.mxu0 0
      %409 = vmatpush1.bf16.msra.mxu0 0
      %410 = vmatprep.mubr.bf16.mxu0 0
      %411 = vmatmul.mubr.bf16.gmra.mrb[0].mxu0 %v372
      %v412 = vpop.f32.mrb[0].mxu0
      %v413 = vadd.f32 %v365, %v412
      %v414 = vpop.f32.mrb[0].mxu0
      %v415 = vpop.f32.mrb[0].mxu0
      %v416 = vpop.f32.mrb[0].mxu0
      %417 = vdwg.mxu0
      %s418 = scalar_lea.vmem %s2, 4
      %v419 = vld [vmem:[%s418] sm:$0xf]
      %v421 = vsel %vm370, %v304, 0
      %v424 = vsel %vm374, %v419, 0
      %426 = vmatprep.subr.bf16.mxu0 0
      %427 = vmatpush1.bf16.msra.mxu0 %v424
      %428 = vmatprep.subr.bf16.mxu0 0
      %429 = vmatpush1.bf16.msra.mxu0 0
      %430 = vmatprep.subr.bf16.mxu0 0
      %431 = vmatpush1.bf16.msra.mxu0 0
      %432 = vmatprep.subr.bf16.mxu0 0
      %433 = vmatpush1.bf16.msra.mxu0 0
      %434 = vmatprep.subr.bf16.mxu0 0
      %435 = vmatpush1.bf16.msra.mxu0 0
      %436 = vmatprep.subr.bf16.mxu0 0
      %437 = vmatpush1.bf16.msra.mxu0 0
      %438 = vmatprep.subr.bf16.mxu0 0
      %439 = vmatpush1.bf16.msra.mxu0 0
      %440 = vmatprep.subr.bf16.mxu0 0
      %441 = vmatpush1.bf16.msra.mxu0 0
      %442 = vmatprep.subr.bf16.mxu0 0
      %443 = vmatpush1.bf16.msra.mxu0 0
      %444 = vmatprep.subr.bf16.mxu0 0
      %445 = vmatpush1.bf16.msra.mxu0 0
      %446 = vmatprep.subr.bf16.mxu0 0
      %447 = vmatpush1.bf16.msra.mxu0 0
      %448 = vmatprep.subr.bf16.mxu0 0
      %449 = vmatpush1.bf16.msra.mxu0 0
      %450 = vmatprep.subr.bf16.mxu0 0
      %451 = vmatpush1.bf16.msra.mxu0 0
      %452 = vmatprep.subr.bf16.mxu0 0
      %453 = vmatpush1.bf16.msra.mxu0 0
      %454 = vmatprep.subr.bf16.mxu0 0
      %455 = vmatpush1.bf16.msra.mxu0 0
      %456 = vmatprep.subr.bf16.mxu0 0
      %457 = vmatpush1.bf16.msra.mxu0 0
      %458 = vmatprep.mubr.bf16.mxu0 0
      %459 = vmatmul.mubr.bf16.gmra.mrb[0].mxu0 %v421
      %v460 = vpop.f32.mrb[0].mxu0
      %v461 = vadd.f32 0.0, %v460
      %v462 = vpop.f32.mrb[0].mxu0
      %v463 = vpop.f32.mrb[0].mxu0
      %v464 = vpop.f32.mrb[0].mxu0
      %465 = vdwg.mxu0
      %v466 = vadd.f32 %v413, %v461
      %s467 = scalar_lea.vmem %s3, 2
      %v468 = vld [vmem:[%s467] sm:$0x3]
      %v471 = vunpack.c.l.b16 %v304
      %v472 = vunpack.c.l.b16 %v305
      %v473 = vpack.c.b16 %v472, %v471
      %v475 = vshrl.u32 %v473, 16
      %v477 = vshll.u32 %v473, 16
      %v479 = vrot.slane %v477, 1
      %v480 = vor.u32 %v475, %v479
      %v482 = vsel %vm322, %v480, 0
      %v485 = vsel %vm326, %v468, 0
      %487 = vmatprep.subr.bf16.mxu0 0
      %488 = vmatpush1.bf16.msra.mxu0 %v485
      %489 = vmatprep.subr.bf16.mxu0 0
      %490 = vmatpush1.bf16.msra.mxu0 0
      %491 = vmatprep.subr.bf16.mxu0 0
      %492 = vmatpush1.bf16.msra.mxu0 0
      %493 = vmatprep.subr.bf16.mxu0 0
      %494 = vmatpush1.bf16.msra.mxu0 0
      %495 = vmatprep.subr.bf16.mxu0 0
      %496 = vmatpush1.bf16.msra.mxu0 0
      %497 = vmatprep.subr.bf16.mxu0 0
      %498 = vmatpush1.bf16.msra.mxu0 0
      %499 = vmatprep.subr.bf16.mxu0 0
      %500 = vmatpush1.bf16.msra.mxu0 0
      %501 = vmatprep.subr.bf16.mxu0 0
      %502 = vmatpush1.bf16.msra.mxu0 0
      %503 = vmatprep.subr.bf16.mxu0 0
      %504 = vmatpush1.bf16.msra.mxu0 0
      %505 = vmatprep.subr.bf16.mxu0 0
      %506 = vmatpush1.bf16.msra.mxu0 0
      %507 = vmatprep.subr.bf16.mxu0 0
      %508 = vmatpush1.bf16.msra.mxu0 0
      %509 = vmatprep.subr.bf16.mxu0 0
      %510 = vmatpush1.bf16.msra.mxu0 0
      %511 = vmatprep.subr.bf16.mxu0 0
      %512 = vmatpush1.bf16.msra.mxu0 0
      %513 = vmatprep.subr.bf16.mxu0 0
      %514 = vmatpush1.bf16.msra.mxu0 0
      %515 = vmatprep.subr.bf16.mxu0 0
      %516 = vmatpush1.bf16.msra.mxu0 0
      %517 = vmatprep.subr.bf16.mxu0 0
      %518 = vmatpush1.bf16.msra.mxu0 0
      %519 = vmatprep.mubr.bf16.mxu0 0
      %520 = vmatmul.mubr.bf16.gmra.mrb[0].mxu0 %v482
      %v521 = vpop.f32.mrb[0].mxu0
      %v522 = vadd.f32 0.0, %v521
      %v523 = vpop.f32.mrb[0].mxu0
      %v524 = vpop.f32.mrb[0].mxu0
      %v525 = vpop.f32.mrb[0].mxu0
      %526 = vdwg.mxu0
      %v527 = vadd.f32 %v466, %v522
      %s528 = scalar_lea.vmem %s2, 8
      %v529 = vld [vmem:[%s528] sm:$0xf]
      %v531 = vsel %vm370, %v306, 0
      %v534 = vsel %vm374, %v529, 0
      %536 = vmatprep.subr.bf16.mxu0 0
      %537 = vmatpush1.bf16.msra.mxu0 %v534
      %538 = vmatprep.subr.bf16.mxu0 0
      %539 = vmatpush1.bf16.msra.mxu0 0
      %540 = vmatprep.subr.bf16.mxu0 0
      %541 = vmatpush1.bf16.msra.mxu0 0
      %542 = vmatprep.subr.bf16.mxu0 0
      %543 = vmatpush1.bf16.msra.mxu0 0
      %544 = vmatprep.subr.bf16.mxu0 0
      %545 = vmatpush1.bf16.msra.mxu0 0
      %546 = vmatprep.subr.bf16.mxu0 0
      %547 = vmatpush1.bf16.msra.mxu0 0
      %548 = vmatprep.subr.bf16.mxu0 0
      %549 = vmatpush1.bf16.msra.mxu0 0
      %550 = vmatprep.subr.bf16.mxu0 0
      %551 = vmatpush1.bf16.msra.mxu0 0
      %552 = vmatprep.subr.bf16.mxu0 0
      %553 = vmatpush1.bf16.msra.mxu0 0
      %554 = vmatprep.subr.bf16.mxu0 0
      %555 = vmatpush1.bf16.msra.mxu0 0
      %556 = vmatprep.subr.bf16.mxu0 0
      %557 = vmatpush1.bf16.msra.mxu0 0
      %558 = vmatprep.subr.bf16.mxu0 0
      %559 = vmatpush1.bf16.msra.mxu0 0
      %560 = vmatprep.subr.bf16.mxu0 0
      %561 = vmatpush1.bf16.msra.mxu0 0
      %562 = vmatprep.subr.bf16.mxu0 0
      %563 = vmatpush1.bf16.msra.mxu0 0
      %564 = vmatprep.subr.bf16.mxu0 0
      %565 = vmatpush1.bf16.msra.mxu0 0
      %566 = vmatprep.subr.bf16.mxu0 0
      %567 = vmatpush1.bf16.msra.mxu0 0
      %568 = vmatprep.mubr.bf16.mxu0 0
      %569 = vmatmul.mubr.bf16.gmra.mrb[0].mxu0 %v531
      %v570 = vpop.f32.mrb[0].mxu0
      %v571 = vadd.f32 0.0, %v570
      %v572 = vpop.f32.mrb[0].mxu0
      %v573 = vpop.f32.mrb[0].mxu0
      %v574 = vpop.f32.mrb[0].mxu0
      %575 = vdwg.mxu0
      %v576 = vadd.f32 %v527, %v571
      %s577 = scalar_lea.vmem %s3, 4
      %v578 = vld [vmem:[%s577] sm:$0x3]
      %v581 = vunpack.c.l.b16 %v306
      %v582 = vunpack.c.l.b16 %v307
      %v583 = vpack.c.b16 %v582, %v581
      %v585 = vshrl.u32 %v583, 16
      %v587 = vshll.u32 %v583, 16
      %v589 = vrot.slane %v587, 1
      %v590 = vor.u32 %v585, %v589
      %v592 = vsel %vm322, %v590, 0
      %v595 = vsel %vm326, %v578, 0
      %597 = vmatprep.subr.bf16.mxu0 0
      %598 = vmatpush1.bf16.msra.mxu0 %v595
      %599 = vmatprep.subr.bf16.mxu0 0
      %600 = vmatpush1.bf16.msra.mxu0 0
      %601 = vmatprep.subr.bf16.mxu0 0
      %602 = vmatpush1.bf16.msra.mxu0 0
      %603 = vmatprep.subr.bf16.mxu0 0
      %604 = vmatpush1.bf16.msra.mxu0 0
      %605 = vmatprep.subr.bf16.mxu0 0
      %606 = vmatpush1.bf16.msra.mxu0 0
      %607 = vmatprep.subr.bf16.mxu0 0
      %608 = vmatpush1.bf16.msra.mxu0 0
      %609 = vmatprep.subr.bf16.mxu0 0
      %610 = vmatpush1.bf16.msra.mxu0 0
      %611 = vmatprep.subr.bf16.mxu0 0
      %612 = vmatpush1.bf16.msra.mxu0 0
      %613 = vmatprep.subr.bf16.mxu0 0
      %614 = vmatpush1.bf16.msra.mxu0 0
      %615 = vmatprep.subr.bf16.mxu0 0
      %616 = vmatpush1.bf16.msra.mxu0 0
      %617 = vmatprep.subr.bf16.mxu0 0
      %618 = vmatpush1.bf16.msra.mxu0 0
      %619 = vmatprep.subr.bf16.mxu0 0
      %620 = vmatpush1.bf16.msra.mxu0 0
      %621 = vmatprep.subr.bf16.mxu0 0
      %622 = vmatpush1.bf16.msra.mxu0 0
      %623 = vmatprep.subr.bf16.mxu0 0
      %624 = vmatpush1.bf16.msra.mxu0 0
      %625 = vmatprep.subr.bf16.mxu0 0
      %626 = vmatpush1.bf16.msra.mxu0 0
      %627 = vmatprep.subr.bf16.mxu0 0
      %628 = vmatpush1.bf16.msra.mxu0 0
      %629 = vmatprep.mubr.bf16.mxu0 0
      %630 = vmatmul.mubr.bf16.gmra.mrb[0].mxu0 %v592
      %v631 = vpop.f32.mrb[0].mxu0
      %v632 = vadd.f32 0.0, %v631
      %v633 = vpop.f32.mrb[0].mxu0
      %v634 = vpop.f32.mrb[0].mxu0
      %v635 = vpop.f32.mrb[0].mxu0
      %636 = vdwg.mxu0
      %v637 = vadd.f32 %v576, %v632
      %v638 = vld [vmem:[%s4] sm:$0x1]
      %v640 = vlaneseq
      %v641 = vshrl.u32 %v640, 7
      %v642 = vsub.s32 0, %v641
      %v643 = vrot.slane %v638, %v642
      %v645 = vadd.f32 %v637, %v643
      %v646 = vmax.f32 %v645, 0.0
      %647 = vst.msk [vmem:[%s299] sm:$0xff] %vm370, %v646
      %p648 = scmp.lt.s32.totalorder %s20, 1
      %s649 = scalar_select %p648, %s20, 1
      %p650 = scmp.lt.s32.totalorder %s21, 7
      %s651 = scalar_select %p650, %s21, 7
      %s652 = smul.addr %s649, 8
      %s653 = sadd.s32 %s651, %s652
      %s654 = smul.addr %s653, 8
      %s655 = scalar_lea.vmem %s5, %s654
      // Predicated region
      $region41: #{backbone_base_forward.3} parent=39 // pred_check
        %p656 = pneg %p169
      $region42: #{backbone_base_forward.3} parent=39 // pred_check_branch
        %658 = sbr.rel (%p656) target = $region44
      $region43: #{backbone_base_forward.3} parent=39 // pred_region
        _
      $region44: #{backbone_base_forward.3} parent=39 // pred_fallthru
        _
    $region40: #{backbone_base_forward.3} parent=5 // pred_fallthru
      _
    %p659 = scmp.le.s32.totalorder 2, %s11
    // Predicated region
    $region45: #{backbone_base_forward.3} parent=5 // pred_check
      %p660 = pneg %p659
    $region46: #{backbone_base_forward.3} parent=5 // pred_check_branch
      %662 = sbr.rel (%p660) target = $region48
    $region47: #{backbone_base_forward.3} parent=5 // pred_region
      %s663 = ssub.s32 %s11, 2
      // Predicated region
      $region49: #{backbone_base_forward.3} parent=47 // pred_check
        %p664 = pneg %p175
      $region50: #{backbone_base_forward.3} parent=47 // pred_check_branch
        %666 = sbr.rel (%p664) target = $region52
      $region51: #{backbone_base_forward.3} parent=47 // pred_region
        %p667 = scmp.lt.s32.totalorder %s22, 1
        %s668 = scalar_select %p667, %s22, 1
        %p669 = scmp.lt.s32.totalorder %s23, 7
        %s670 = scalar_select %p669, %s23, 7
        %s671 = smul.addr %s668, 8
        %s672 = sadd.s32 %s670, %s671
        %s673 = smul.addr %s672, 8
        %s674 = scalar_lea.vmem %s5, %s673
      $region52: #{backbone_base_forward.3} parent=47 // pred_fallthru
        _
    $region48: #{backbone_base_forward.3} parent=5 // pred_fallthru
      _
  $region6: #{backbone_base_forward.3} parent=0 // loop_footer
    %s15 = sadd.s32 1, %s11
  $region7: #{backbone_base_forward.3} parent=0 // loop_footer_branch
    %10 = sbr.rel target = $region3
  $region8: #{backbone_base_forward.3} parent=0 // loop_exit
    _

// kernel: backbone_base_forward.4
$region0: #{backbone_base_forward.4}
  #allocation0 [shape = 'u32[]', space=smem, size = 0x4, offset = 0x4, fixed_abs, tag = 'smem constant byte address 0x4 - core index']
  #allocation1 [shape = 'u32[144,128]{1,0:T(1,128)}', space=vmem, size = 0x12000, scoped, tag = 'internal scratch']
  %s0 = inlined_call_operand.vmem [shape: bf16[2,5,2,5,16], index: 0, kind: input, shape index: {}, may-alias: {0,1}]
  %s1 = inlined_call_operand.vmem [shape: bf16[2,5,2,5,16], index: 1, kind: input, shape index: {}, may-alias: {0,1}]
  %s2 = inlined_call_operand.vmem [shape: bf16[3,16,16], index: 2, kind: input, shape index: {}]
  %s3 = inlined_call_operand.vmem [shape: bf16[3,8,16], index: 3, kind: input, shape index: {}]
  %s4 = inlined_call_operand.vmem [shape: f32[1,16], index: 4, kind: input, shape index: {}]
  %s5 = inlined_call_operand.vmem [shape: f32[2,4,4,16], index: 5, kind: output, shape index: {}]
  %s6 = sld [smem:[#allocation0]]
  $region53: #{backbone_base_forward.4} parent=0
    _
  %s8 = ssub.s32 1, %s6
  %s9 = scalar_select 0, %s8, %s6
  loop: start=0, step=1, limit=10
  $region2: #{backbone_base_forward.4} parent=0 // loop_pre_header
    _
  $region3: #{backbone_base_forward.4} parent=0 // loop_header
    %s11 = sphi 0, %s15
    %p12 = scmp.ge.s32.totalorder %s11, 10
    %s18 = sphi 0, %s30
    %s19 = sphi 0, %s26
    %s20 = sphi 0, %s18
    %s21 = sphi 0, %s19
    %s22 = sphi 0, %s20
    %s23 = sphi 0, %s21
    %s35 = sphi 0, %s37
    %s38 = sphi 0, %s35
    %s39 = sphi 0, %s38
    %s55 = sphi 0, %s39
    %s65 = sphi 0, %s67
    %s68 = sphi 0, %s65
    %s69 = sphi 0, %s68
    %s85 = sphi 0, %s69
    %s89 = sphi 0, %s89
    %s91 = sphi 0, %s89
    %s92 = sphi 0, %s91
    %s106 = sphi 0, %s92
    %s110 = sphi 0, %s110
    %s112 = sphi 0, %s110
    %s113 = sphi 0, %s112
    %s127 = sphi 0, %s113
    %s131 = sphi 0, %s131
    %s133 = sphi 0, %s131
    %s134 = sphi 0, %s133
    %s148 = sphi 0, %s134
    %s156 = sphi 0, %s158
    %s159 = sphi 0, %s156
    %s160 = sphi 0, %s159
    %s176 = sphi 0, %s160
  $region4: #{backbone_base_forward.4} parent=0 // loop_header_branch
    %14 = sbr.rel (%p12) target = $region8
  $region5: #{backbone_base_forward.4} parent=0 // loop_body
    %s16 = ssub.s32 %s11, 1
    %s17 = ssub.s32 %s11, 2
    %s24 = sadd.s32 1, %s19
    %p25 = scmp.ge.s32.totalorder %s24, 4
    %s26 = scalar_select %p25, 0, %s24
    %s27 = sadd.s32 1, %s18
    %s28 = scalar_select %p25, %s27, %s18
    %p29 = scmp.ge.s32.totalorder %s28, 2
    %s30 = scalar_select %p29, 0, %s28
    %s31 = ssub.s32 %s18, %s30
    %s32 = ssub.s32 %s19, %s26
    %s33 = sor.u32 %s31, %s32
    %p34 = scmp.eq.s32.totalorder %s33, 0
    %s36 = sadd.s32 %s35, 1
    %s37 = scalar_select %p34, %s35, %s36
    %p40 = pneg %p34
    %p41 = scmp.eq.s32.totalorder %s11, 7
    %p42 = por %p40, %p41
    %p43 = scmp.ne.s32.totalorder %s35, %s38
    %p44 = scmp.eq.s32.totalorder %s11, 0
    %p45 = por %p43, %p44
    %p46 = scmp.ne.s32.totalorder %s35, %s38
    %p47 = scmp.eq.s32.totalorder %s16, 7
    %p48 = por %p46, %p47
    %p49 = scmp.ne.s32.totalorder %s38, %s39
    %p50 = scmp.eq.s32.totalorder %s16, 0
    %p51 = por %p49, %p50
    %p52 = scmp.ne.s32.totalorder %s38, %s39
    %p53 = scmp.eq.s32.totalorder %s17, 7
    %p54 = por %p52, %p53
    %p56 = scmp.ne.s32.totalorder %s39, %s55
    %p57 = scmp.eq.s32.totalorder %s17, 0
    %p58 = por %p56, %p57
    %s59 = sadd.s32 %s19, 1
    %s60 = sadd.s32 %s26, 1
    %s61 = ssub.s32 %s18, %s30
    %s62 = ssub.s32 %s59, %s60
    %s63 = sor.u32 %s61, %s62
    %p64 = scmp.eq.s32.totalorder %s63, 0
    %s66 = sadd.s32 %s65, 1
    %s67 = scalar_select %p64, %s65, %s66
    %p70 = pneg %p64
    %p71 = scmp.eq.s32.totalorder %s11, 7
    %p72 = por %p70, %p71
    %p73 = scmp.ne.s32.totalorder %s65, %s68
    %p74 = scmp.eq.s32.totalorder %s11, 0
    %p75 = por %p73, %p74
    %p76 = scmp.ne.s32.totalorder %s65, %s68
    %p77 = scmp.eq.s32.totalorder %s16, 7
    %p78 = por %p76, %p77
    %p79 = scmp.ne.s32.totalorder %s68, %s69
    %p80 = scmp.eq.s32.totalorder %s16, 0
    %p81 = por %p79, %p80
    %p82 = scmp.ne.s32.totalorder %s68, %s69
    %p83 = scmp.eq.s32.totalorder %s17, 7
    %p84 = por %p82, %p83
    %p86 = scmp.ne.s32.totalorder %s69, %s85
    %p87 = scmp.eq.s32.totalorder %s17, 0
    %p88 = por %p86, %p87
    %s90 = sadd.s32 %s89, 1
    %p93 = scmp.eq.s32.totalorder %s11, 7
    %p94 = scmp.ne.s32.totalorder %s89, %s91
    %p95 = scmp.eq.s32.totalorder %s11, 0
    %p96 = por %p94, %p95
    %p97 = scmp.ne.s32.totalorder %s89, %s91
    %p98 = scmp.eq.s32.totalorder %s16, 7
    %p99 = por %p97, %p98
    %p100 = scmp.ne.s32.totalorder %s91, %s92
    %p101 = scmp.eq.s32.totalorder %s16, 0
    %p102 = por %p100, %p101
    %p103 = scmp.ne.s32.totalorder %s91, %s92
    %p104 = scmp.eq.s32.totalorder %s17, 7
    %p105 = por %p103, %p104
    %p107 = scmp.ne.s32.totalorder %s92, %s106
    %p108 = scmp.eq.s32.totalorder %s17, 0
    %p109 = por %p107, %p108
    %s111 = sadd.s32 %s110, 1
    %p114 = scmp.eq.s32.totalorder %s11, 7
    %p115 = scmp.ne.s32.totalorder %s110, %s112
    %p116 = scmp.eq.s32.totalorder %s11, 0
    %p117 = por %p115, %p116
    %p118 = scmp.ne.s32.totalorder %s110, %s112
    %p119 = scmp.eq.s32.totalorder %s16, 7
    %p120 = por %p118, %p119
    %p121 = scmp.ne.s32.totalorder %s112, %s113
    %p122 = scmp.eq.s32.totalorder %s16, 0
    %p123 = por %p121, %p122
    %p124 = scmp.ne.s32.totalorder %s112, %s113
    %p125 = scmp.eq.s32.totalorder %s17, 7
    %p126 = por %p124, %p125
    %p128 = scmp.ne.s32.totalorder %s113, %s127
    %p129 = scmp.eq.s32.totalorder %s17, 0
    %p130 = por %p128, %p129
    %s132 = sadd.s32 %s131, 1
    %p135 = scmp.eq.s32.totalorder %s11, 7
    %p136 = scmp.ne.s32.totalorder %s131, %s133
    %p137 = scmp.eq.s32.totalorder %s11, 0
    %p138 = por %p136, %p137
    %p139 = scmp.ne.s32.totalorder %s131, %s133
    %p140 = scmp.eq.s32.totalorder %s16, 7
    %p141 = por %p139, %p140
    %p142 = scmp.ne.s32.totalorder %s133, %s134
    %p143 = scmp.eq.s32.totalorder %s16, 0
    %p144 = por %p142, %p143
    %p145 = scmp.ne.s32.totalorder %s133, %s134
    %p146 = scmp.eq.s32.totalorder %s17, 7
    %p147 = por %p145, %p146
    %p149 = scmp.ne.s32.totalorder %s134, %s148
    %p150 = scmp.eq.s32.totalorder %s17, 0
    %p151 = por %p149, %p150
    %s152 = ssub.s32 %s18, %s30
    %s153 = ssub.s32 %s19, %s26
    %s154 = sor.u32 %s152, %s153
    %p155 = scmp.eq.s32.totalorder %s154, 0
    %s157 = sadd.s32 %s156, 1
    %s158 = scalar_select %p155, %s156, %s157
    %p161 = pneg %p155
    %p162 = scmp.eq.s32.totalorder %s11, 7
    %p163 = por %p161, %p162
    %p164 = scmp.ne.s32.totalorder %s156, %s159
    %p165 = scmp.eq.s32.totalorder %s11, 0
    %p166 = por %p164, %p165
    %p167 = scmp.ne.s32.totalorder %s156, %s159
    %p168 = scmp.eq.s32.totalorder %s16, 7
    %p169 = por %p167, %p168
    %p170 = scmp.ne.s32.totalorder %s159, %s160
    %p171 = scmp.eq.s32.totalorder %s16, 0
    %p172 = por %p170, %p171
    %p173 = scmp.ne.s32.totalorder %s159, %s160
    %p174 = scmp.eq.s32.totalorder %s17, 7
    %p175 = por %p173, %p174
    %p177 = scmp.ne.s32.totalorder %s160, %s176
    %p178 = scmp.eq.s32.totalorder %s17, 0
    %p179 = por %p177, %p178
    %p180 = scmp.le.s32.totalorder 1, %s11
    %p181 = scmp.lt.s32.totalorder %s11, 9
    %p182 = pnand %p180, %p181
    %p183 = pneg %p182
    // Predicated region
    $region9: #{backbone_base_forward.4} parent=5 // pred_check
      _
    $region10: #{backbone_base_forward.4} parent=5 // pred_check_branch
      %185 = sbr.rel (%p182) target = $region12
    $region11: #{backbone_base_forward.4} parent=5 // pred_region
      %s186 = ssub.s32 %s11, 1
      // Predicated region
      $region13: #{backbone_base_forward.4} parent=11 // pred_check
        %p187 = pneg %p102
      $region14: #{backbone_base_forward.4} parent=11 // pred_check_branch
        %189 = sbr.rel (%p187) target = $region16
      $region15: #{backbone_base_forward.4} parent=11 // pred_region
        _
      $region16: #{backbone_base_forward.4} parent=11 // pred_fallthru
        _
      // Predicated region
      $region17: #{backbone_base_forward.4} parent=11 // pred_check
        %p190 = pneg %p123
      $region18: #{backbone_base_forward.4} parent=11 // pred_check_branch
        %192 = sbr.rel (%p190) target = $region20
      $region19: #{backbone_base_forward.4} parent=11 // pred_region
        _
      $region20: #{backbone_base_forward.4} parent=11 // pred_fallthru
        _
      // Predicated region
      $region21: #{backbone_base_forward.4} parent=11 // pred_check
        %p193 = pneg %p144
      $region22: #{backbone_base_forward.4} parent=11 // pred_check_branch
        %195 = sbr.rel (%p193) target = $region24
      $region23: #{backbone_base_forward.4} parent=11 // pred_region
        _
      $region24: #{backbone_base_forward.4} parent=11 // pred_fallthru
        _
    $region12: #{backbone_base_forward.4} parent=5 // pred_fallthru
      _
    %p196 = scmp.lt.s32.totalorder %s11, 8
    // Predicated region
    $region25: #{backbone_base_forward.4} parent=5 // pred_check
      %p197 = pneg %p196
    $region26: #{backbone_base_forward.4} parent=5 // pred_check_branch
      %199 = sbr.rel (%p197) target = $region28
    $region27: #{backbone_base_forward.4} parent=5 // pred_region
      // Predicated region
      $region29: #{backbone_base_forward.4} parent=27 // pred_check
        %p200 = pneg %p45
      $region30: #{backbone_base_forward.4} parent=27 // pred_check_branch
        %202 = sbr.rel (%p200) target = $region32
      $region31: #{backbone_base_forward.4} parent=27 // pred_region
        %p203 = scmp.lt.s32.totalorder %s18, 1
        %s204 = scalar_select %p203, %s18, 1
        %p205 = scmp.lt.s32.totalorder %s19, 4
        %s206 = scalar_select %p205, %s19, 4
        %s207 = smul.addr %s206, 2
        %s208 = smul.addr %s204, 10
        %s209 = sadd.s32 %s207, %s208
        %s210 = smul.addr %s209, 4
        %s211 = scalar_lea.vmem %s0, %s210
      $region32: #{backbone_base_forward.4} parent=27 // pred_fallthru
        _
      // Predicated region
      $region33: #{backbone_base_forward.4} parent=27 // pred_check
        %p212 = pneg %p75
      $region34: #{backbone_base_forward.4} parent=27 // pred_check_branch
        %214 = sbr.rel (%p212) target = $region36
      $region35: #{backbone_base_forward.4} parent=27 // pred_region
        %s215 = sadd.s32 %s19, 1
        %p216 = scmp.lt.s32.totalorder %s18, 1
        %s217 = scalar_select %p216, %s18, 1
        %p218 = scmp.lt.s32.totalorder %s215, 4
        %s219 = scalar_select %p218, %s215, 4
        %s220 = smul.addr %s219, 2
        %s221 = smul.addr %s217, 10
        %s222 = sadd.s32 %s220, %s221
        %s223 = smul.addr %s222, 4
        %s224 = scalar_lea.vmem %s1, %s223
        %s225 = sadd.s32 %s19, 1
      $region36: #{backbone_base_forward.4} parent=27 // pred_fallthru
        _
    $region28: #{backbone_base_forward.4} parent=5 // pred_fallthru
      _
    %p226 = scmp.le.s32.totalorder 1, %s11
    %p227 = scmp.lt.s32.totalorder %s11, 9
    %p228 = pnand %p226, %p227
    %p229 = pneg %p228
    // Predicated region
    $region37: #{backbone_base_forward.4} parent=5 // pred_check
      _
    $region38: #{backbone_base_forward.4} parent=5 // pred_check_branch
      %231 = sbr.rel (%p228) target = $region40
    $region39: #{backbone_base_forward.4} parent=5 // pred_region
      %s232 = ssub.s32 %s11, 1
      %p233 = scmp.lt.s32.totalorder %s20, 1
      %s234 = scalar_select %p233, %s20, 1
      %p235 = scmp.lt.s32.totalorder %s21, 4
      %s236 = scalar_select %p235, %s21, 4
      %s237 = smul.addr %s236, 2
      %s238 = smul.addr %s234, 10
      %s239 = sadd.s32 %s237, %s238
      %s240 = smul.addr %s239, 4
      %s241 = scalar_lea.vmem %s0, %s240
      %p242 = pneg %p51
      %p243 = pneg %p48
      %s244 = sadd.s32 %s21, 1
      %p245 = scmp.lt.s32.totalorder %s20, 1
      %s246 = scalar_select %p245, %s20, 1
      %p247 = scmp.lt.s32.totalorder %s244, 4
      %s248 = scalar_select %p247, %s244, 4
      %s249 = smul.addr %s248, 2
      %s250 = smul.addr %s246, 10
      %s251 = sadd.s32 %s249, %s250
      %s252 = smul.addr %s251, 4
      %s253 = scalar_lea.vmem %s1, %s252
      %p254 = pneg %p81
      %p255 = pneg %p78
      %p256 = pneg %p102
      %p257 = pneg %p99
      %p258 = pneg %p123
      %p259 = pneg %p120
      %p260 = pneg %p144
      %p261 = pneg %p141
      %p262 = pneg %p172
      %p263 = pneg %p169
      %p264 = scmp.lt.s32.totalorder %s20, 1
      %s265 = scalar_select %p264, %s20, 1
      %p266 = scmp.lt.s32.totalorder %s21, 3
      %s267 = scalar_select %p266, %s21, 3
      %s268 = smul.addr %s265, 4
      %s269 = sadd.s32 %s267, %s268
      %s270 = smul.addr %s269, 4
      %s271 = scalar_lea.vmem %s5, %s270
      %p272 = scmp.lt.s32.totalorder %s20, 1
      %s273 = scalar_select %p272, %s20, 1
      %p274 = scmp.lt.s32.totalorder %s21, 4
      %s275 = scalar_select %p274, %s21, 4
      %s276 = smul.addr %s275, 2
      %s277 = smul.addr %s273, 10
      %s278 = sadd.s32 %s276, %s277
      %s279 = smul.addr %s278, 4
      %s280 = scalar_lea.vmem %s0, %s279
      %s281 = sadd.s32 %s21, 1
      %p282 = scmp.lt.s32.totalorder %s20, 1
      %s283 = scalar_select %p282, %s20, 1
      %p284 = scmp.lt.s32.totalorder %s281, 4
      %s285 = scalar_select %p284, %s281, 4
      %s286 = smul.addr %s285, 2
      %s287 = smul.addr %s283, 10
      %s288 = sadd.s32 %s286, %s287
      %s289 = smul.addr %s288, 4
      %s290 = scalar_lea.vmem %s1, %s289
      %s291 = sadd.s32 %s21, 1
      %p292 = scmp.lt.s32.totalorder %s20, 1
      %s293 = scalar_select %p292, %s20, 1
      %p294 = scmp.lt.s32.totalorder %s21, 3
      %s295 = scalar_select %p294, %s21, 3
      %s296 = smul.addr %s293, 4
      %s297 = sadd.s32 %s295, %s296
      %s298 = smul.addr %s297, 4
      %s299 = scalar_lea.vmem %s5, %s298
      %v301 = vld [vmem:[%s280] sm:$0x7]
      %s302 = scalar_lea.vmem %s280, 4
      %v303 = vld [vmem:[%s302] sm:$0x7]
      %v304 = vld [vmem:[%s290] sm:$0x7]
      %v305 = vld [vmem:[%s2] sm:$0xf]
      %v306 = vld [vmem:[%s2 + $0x4] sm:$0xf]
      %v307 = vld [vmem:[%s3] sm:$0xf]
      %v309 = vunpack.c.l.b16 %v301
      %v310 = vpack.c.b16 %v309, %v309
      %v312 = vshrl.u32 %v310, 16
      %v314 = vshll.u32 %v310, 16
      %v316 = vrot.slane %v314, 1
      %v317 = vor.u32 %v312, %v316
      %vm318 = vcmask 64512
      %v320 = vsel %vm318, %v317, 0
      %vm322 = vcmask 1043456
      %v324 = vsel %vm322, %v307, 0
      %326 = vmatprep.subr.bf16.mxu0 0
      %327 = vmatpush1.bf16.msra.mxu0 %v324
      %328 = vmatprep.subr.bf16.mxu0 0
      %329 = vmatpush1.bf16.msra.mxu0 0
      %330 = vmatprep.subr.bf16.mxu0 0
      %331 = vmatpush1.bf16.msra.mxu0 0
      %332 = vmatprep.subr.bf16.mxu0 0
      %333 = vmatpush1.bf16.msra.mxu0 0
      %334 = vmatprep.subr.bf16.mxu0 0
      %335 = vmatpush1.bf16.msra.mxu0 0
      %336 = vmatprep.subr.bf16.mxu0 0
      %337 = vmatpush1.bf16.msra.mxu0 0
      %338 = vmatprep.subr.bf16.mxu0 0
      %339 = vmatpush1.bf16.msra.mxu0 0
      %340 = vmatprep.subr.bf16.mxu0 0
      %341 = vmatpush1.bf16.msra.mxu0 0
      %342 = vmatprep.subr.bf16.mxu0 0
      %343 = vmatpush1.bf16.msra.mxu0 0
      %344 = vmatprep.subr.bf16.mxu0 0
      %345 = vmatpush1.bf16.msra.mxu0 0
      %346 = vmatprep.subr.bf16.mxu0 0
      %347 = vmatpush1.bf16.msra.mxu0 0
      %348 = vmatprep.subr.bf16.mxu0 0
      %349 = vmatpush1.bf16.msra.mxu0 0
      %350 = vmatprep.subr.bf16.mxu0 0
      %351 = vmatpush1.bf16.msra.mxu0 0
      %352 = vmatprep.subr.bf16.mxu0 0
      %353 = vmatpush1.bf16.msra.mxu0 0
      %354 = vmatprep.subr.bf16.mxu0 0
      %355 = vmatpush1.bf16.msra.mxu0 0
      %356 = vmatprep.subr.bf16.mxu0 0
      %357 = vmatpush1.bf16.msra.mxu0 0
      %358 = vmatprep.mubr.bf16.mxu0 0
      %359 = vmatmul.mubr.bf16.gmra.mrb[0].mxu0 %v320
      %v360 = vpop.f32.mrb[0].mxu0
      %v361 = vadd.f32 0.0, %v360
      %v362 = vpop.f32.mrb[0].mxu0
      %v363 = vpop.f32.mrb[0].mxu0
      %v364 = vpop.f32.mrb[0].mxu0
      %365 = vdwg.mxu0
      %v368 = vunpack.c.l.b16 %v305
      %v369 = vunpack.c.l.b16 %v306
      %v370 = vpack.c.b16 %v369, %v368
      %vm372 = vcmask 130048
      %v374 = vsel %vm372, %v301, 0
      %376 = vmatprep.subr.bf16.mxu0 0
      %377 = vmatpush1.bf16.msra.mxu0 %v370
      %378 = vmatprep.subr.bf16.mxu0 0
      %379 = vmatpush1.bf16.msra.mxu0 0
      %380 = vmatprep.subr.bf16.mxu0 0
      %381 = vmatpush1.bf16.msra.mxu0 0
      %382 = vmatprep.subr.bf16.mxu0 0
      %383 = vmatpush1.bf16.msra.mxu0 0
      %384 = vmatprep.subr.bf16.mxu0 0
      %385 = vmatpush1.bf16.msra.mxu0 0
      %386 = vmatprep.subr.bf16.mxu0 0
      %387 = vmatpush1.bf16.msra.mxu0 0
      %388 = vmatprep.subr.bf16.mxu0 0
      %389 = vmatpush1.bf16.msra.mxu0 0
      %390 = vmatprep.subr.bf16.mxu0 0
      %391 = vmatpush1.bf16.msra.mxu0 0
      %392 = vmatprep.subr.bf16.mxu0 0
      %393 = vmatpush1.bf16.msra.mxu0 0
      %394 = vmatprep.subr.bf16.mxu0 0
      %395 = vmatpush1.bf16.msra.mxu0 0
      %396 = vmatprep.subr.bf16.mxu0 0
      %397 = vmatpush1.bf16.msra.mxu0 0
      %398 = vmatprep.subr.bf16.mxu0 0
      %399 = vmatpush1.bf16.msra.mxu0 0
      %400 = vmatprep.subr.bf16.mxu0 0
      %401 = vmatpush1.bf16.msra.mxu0 0
      %402 = vmatprep.subr.bf16.mxu0 0
      %403 = vmatpush1.bf16.msra.mxu0 0
      %404 = vmatprep.subr.bf16.mxu0 0
      %405 = vmatpush1.bf16.msra.mxu0 0
      %406 = vmatprep.subr.bf16.mxu0 0
      %407 = vmatpush1.bf16.msra.mxu0 0
      %408 = vmatprep.mubr.bf16.mxu0 0
      %409 = vmatmul.mubr.bf16.gmra.mrb[0].mxu0 %v374
      %v410 = vpop.f32.mrb[0].mxu0
      %v411 = vadd.f32 %v361, %v410
      %v412 = vpop.f32.mrb[0].mxu0
      %v413 = vpop.f32.mrb[0].mxu0
      %v414 = vpop.f32.mrb[0].mxu0
      %415 = vdwg.mxu0
      %s416 = scalar_lea.vmem %s2, 8
      %v417 = vld [vmem:[%s416] sm:$0xf]
      %v418 = vld [vmem:[%s416 + $0x4] sm:$0xf]
      %v421 = vunpack.c.l.b16 %v417
      %v422 = vunpack.c.l.b16 %v418
      %v423 = vpack.c.b16 %v422, %v421
      %v426 = vsel %vm372, %v303, 0
      %428 = vmatprep.subr.bf16.mxu0 0
      %429 = vmatpush1.bf16.msra.mxu0 %v423
      %430 = vmatprep.subr.bf16.mxu0 0
      %431 = vmatpush1.bf16.msra.mxu0 0
      %432 = vmatprep.subr.bf16.mxu0 0
      %433 = vmatpush1.bf16.msra.mxu0 0
      %434 = vmatprep.subr.bf16.mxu0 0
      %435 = vmatpush1.bf16.msra.mxu0 0
      %436 = vmatprep.subr.bf16.mxu0 0
      %437 = vmatpush1.bf16.msra.mxu0 0
      %438 = vmatprep.subr.bf16.mxu0 0
      %439 = vmatpush1.bf16.msra.mxu0 0
      %440 = vmatprep.subr.bf16.mxu0 0
      %441 = vmatpush1.bf16.msra.mxu0 0
      %442 = vmatprep.subr.bf16.mxu0 0
      %443 = vmatpush1.bf16.msra.mxu0 0
      %444 = vmatprep.subr.bf16.mxu0 0
      %445 = vmatpush1.bf16.msra.mxu0 0
      %446 = vmatprep.subr.bf16.mxu0 0
      %447 = vmatpush1.bf16.msra.mxu0 0
      %448 = vmatprep.subr.bf16.mxu0 0
      %449 = vmatpush1.bf16.msra.mxu0 0
      %450 = vmatprep.subr.bf16.mxu0 0
      %451 = vmatpush1.bf16.msra.mxu0 0
      %452 = vmatprep.subr.bf16.mxu0 0
      %453 = vmatpush1.bf16.msra.mxu0 0
      %454 = vmatprep.subr.bf16.mxu0 0
      %455 = vmatpush1.bf16.msra.mxu0 0
      %456 = vmatprep.subr.bf16.mxu0 0
      %457 = vmatpush1.bf16.msra.mxu0 0
      %458 = vmatprep.subr.bf16.mxu0 0
      %459 = vmatpush1.bf16.msra.mxu0 0
      %460 = vmatprep.mubr.bf16.mxu0 0
      %461 = vmatmul.mubr.bf16.gmra.mrb[0].mxu0 %v426
      %v462 = vpop.f32.mrb[0].mxu0
      %v463 = vadd.f32 0.0, %v462
      %v464 = vpop.f32.mrb[0].mxu0
      %v465 = vpop.f32.mrb[0].mxu0
      %v466 = vpop.f32.mrb[0].mxu0
      %467 = vdwg.mxu0
      %v468 = vadd.f32 %v411, %v463
      %s469 = scalar_lea.vmem %s3, 4
      %v470 = vld [vmem:[%s469] sm:$0xf]
      %v472 = vunpack.c.l.b16 %v303
      %v473 = vpack.c.b16 %v472, %v472
      %v475 = vshrl.u32 %v473, 16
      %v477 = vshll.u32 %v473, 16
      %v479 = vrot.slane %v477, 1
      %v480 = vor.u32 %v475, %v479
      %v482 = vsel %vm318, %v480, 0
      %v485 = vsel %vm322, %v470, 0
      %487 = vmatprep.subr.bf16.mxu0 0
      %488 = vmatpush1.bf16.msra.mxu0 %v485
      %489 = vmatprep.subr.bf16.mxu0 0
      %490 = vmatpush1.bf16.msra.mxu0 0
      %491 = vmatprep.subr.bf16.mxu0 0
      %492 = vmatpush1.bf16.msra.mxu0 0
      %493 = vmatprep.subr.bf16.mxu0 0
      %494 = vmatpush1.bf16.msra.mxu0 0
      %495 = vmatprep.subr.bf16.mxu0 0
      %496 = vmatpush1.bf16.msra.mxu0 0
      %497 = vmatprep.subr.bf16.mxu0 0
      %498 = vmatpush1.bf16.msra.mxu0 0
      %499 = vmatprep.subr.bf16.mxu0 0
      %500 = vmatpush1.bf16.msra.mxu0 0
      %501 = vmatprep.subr.bf16.mxu0 0
      %502 = vmatpush1.bf16.msra.mxu0 0
      %503 = vmatprep.subr.bf16.mxu0 0
      %504 = vmatpush1.bf16.msra.mxu0 0
      %505 = vmatprep.subr.bf16.mxu0 0
      %506 = vmatpush1.bf16.msra.mxu0 0
      %507 = vmatprep.subr.bf16.mxu0 0
      %508 = vmatpush1.bf16.msra.mxu0 0
      %509 = vmatprep.subr.bf16.mxu0 0
      %510 = vmatpush1.bf16.msra.mxu0 0
      %511 = vmatprep.subr.bf16.mxu0 0
      %512 = vmatpush1.bf16.msra.mxu0 0
      %513 = vmatprep.subr.bf16.mxu0 0
      %514 = vmatpush1.bf16.msra.mxu0 0
      %515 = vmatprep.subr.bf16.mxu0 0
      %516 = vmatpush1.bf16.msra.mxu0 0
      %517 = vmatprep.subr.bf16.mxu0 0
      %518 = vmatpush1.bf16.msra.mxu0 0
      %519 = vmatprep.mubr.bf16.mxu0 0
      %520 = vmatmul.mubr.bf16.gmra.mrb[0].mxu0 %v482
      %v521 = vpop.f32.mrb[0].mxu0
      %v522 = vadd.f32 0.0, %v521
      %v523 = vpop.f32.mrb[0].mxu0
      %v524 = vpop.f32.mrb[0].mxu0
      %v525 = vpop.f32.mrb[0].mxu0
      %526 = vdwg.mxu0
      %v527 = vadd.f32 %v468, %v522
      %s528 = scalar_lea.vmem %s2, 16
      %v529 = vld [vmem:[%s528] sm:$0xf]
      %v530 = vld [vmem:[%s528 + $0x4] sm:$0xf]
      %v533 = vunpack.c.l.b16 %v529
      %v534 = vunpack.c.l.b16 %v530
      %v535 = vpack.c.b16 %v534, %v533
      %v538 = vsel %vm372, %v304, 0
      %540 = vmatprep.subr.bf16.mxu0 0
      %541 = vmatpush1.bf16.msra.mxu0 %v535
      %542 = vmatprep.subr.bf16.mxu0 0
      %543 = vmatpush1.bf16.msra.mxu0 0
      %544 = vmatprep.subr.bf16.mxu0 0
      %545 = vmatpush1.bf16.msra.mxu0 0
      %546 = vmatprep.subr.bf16.mxu0 0
      %547 = vmatpush1.bf16.msra.mxu0 0
      %548 = vmatprep.subr.bf16.mxu0 0
      %549 = vmatpush1.bf16.msra.mxu0 0
      %550 = vmatprep.subr.bf16.mxu0 0
      %551 = vmatpush1.bf16.msra.mxu0 0
      %552 = vmatprep.subr.bf16.mxu0 0
      %553 = vmatpush1.bf16.msra.mxu0 0
      %554 = vmatprep.subr.bf16.mxu0 0
      %555 = vmatpush1.bf16.msra.mxu0 0
      %556 = vmatprep.subr.bf16.mxu0 0
      %557 = vmatpush1.bf16.msra.mxu0 0
      %558 = vmatprep.subr.bf16.mxu0 0
      %559 = vmatpush1.bf16.msra.mxu0 0
      %560 = vmatprep.subr.bf16.mxu0 0
      %561 = vmatpush1.bf16.msra.mxu0 0
      %562 = vmatprep.subr.bf16.mxu0 0
      %563 = vmatpush1.bf16.msra.mxu0 0
      %564 = vmatprep.subr.bf16.mxu0 0
      %565 = vmatpush1.bf16.msra.mxu0 0
      %566 = vmatprep.subr.bf16.mxu0 0
      %567 = vmatpush1.bf16.msra.mxu0 0
      %568 = vmatprep.subr.bf16.mxu0 0
      %569 = vmatpush1.bf16.msra.mxu0 0
      %570 = vmatprep.subr.bf16.mxu0 0
      %571 = vmatpush1.bf16.msra.mxu0 0
      %572 = vmatprep.mubr.bf16.mxu0 0
      %573 = vmatmul.mubr.bf16.gmra.mrb[0].mxu0 %v538
      %v574 = vpop.f32.mrb[0].mxu0
      %v575 = vadd.f32 0.0, %v574
      %v576 = vpop.f32.mrb[0].mxu0
      %v577 = vpop.f32.mrb[0].mxu0
      %v578 = vpop.f32.mrb[0].mxu0
      %579 = vdwg.mxu0
      %v580 = vadd.f32 %v527, %v575
      %s581 = scalar_lea.vmem %s3, 8
      %v582 = vld [vmem:[%s581] sm:$0xf]
      %v584 = vunpack.c.l.b16 %v304
      %v585 = vpack.c.b16 %v584, %v584
      %v587 = vshrl.u32 %v585, 16
      %v589 = vshll.u32 %v585, 16
      %v591 = vrot.slane %v589, 1
      %v592 = vor.u32 %v587, %v591
      %v594 = vsel %vm318, %v592, 0
      %v597 = vsel %vm322, %v582, 0
      %599 = vmatprep.subr.bf16.mxu0 0
      %600 = vmatpush1.bf16.msra.mxu0 %v597
      %601 = vmatprep.subr.bf16.mxu0 0
      %602 = vmatpush1.bf16.msra.mxu0 0
      %603 = vmatprep.subr.bf16.mxu0 0
      %604 = vmatpush1.bf16.msra.mxu0 0
      %605 = vmatprep.subr.bf16.mxu0 0
      %606 = vmatpush1.bf16.msra.mxu0 0
      %607 = vmatprep.subr.bf16.mxu0 0
      %608 = vmatpush1.bf16.msra.mxu0 0
      %609 = vmatprep.subr.bf16.mxu0 0
      %610 = vmatpush1.bf16.msra.mxu0 0
      %611 = vmatprep.subr.bf16.mxu0 0
      %612 = vmatpush1.bf16.msra.mxu0 0
      %613 = vmatprep.subr.bf16.mxu0 0
      %614 = vmatpush1.bf16.msra.mxu0 0
      %615 = vmatprep.subr.bf16.mxu0 0
      %616 = vmatpush1.bf16.msra.mxu0 0
      %617 = vmatprep.subr.bf16.mxu0 0
      %618 = vmatpush1.bf16.msra.mxu0 0
      %619 = vmatprep.subr.bf16.mxu0 0
      %620 = vmatpush1.bf16.msra.mxu0 0
      %621 = vmatprep.subr.bf16.mxu0 0
      %622 = vmatpush1.bf16.msra.mxu0 0
      %623 = vmatprep.subr.bf16.mxu0 0
      %624 = vmatpush1.bf16.msra.mxu0 0
      %625 = vmatprep.subr.bf16.mxu0 0
      %626 = vmatpush1.bf16.msra.mxu0 0
      %627 = vmatprep.subr.bf16.mxu0 0
      %628 = vmatpush1.bf16.msra.mxu0 0
      %629 = vmatprep.subr.bf16.mxu0 0
      %630 = vmatpush1.bf16.msra.mxu0 0
      %631 = vmatprep.mubr.bf16.mxu0 0
      %632 = vmatmul.mubr.bf16.gmra.mrb[0].mxu0 %v594
      %v633 = vpop.f32.mrb[0].mxu0
      %v634 = vadd.f32 0.0, %v633
      %v635 = vpop.f32.mrb[0].mxu0
      %v636 = vpop.f32.mrb[0].mxu0
      %v637 = vpop.f32.mrb[0].mxu0
      %638 = vdwg.mxu0
      %v639 = vadd.f32 %v580, %v634
      %v640 = vld [vmem:[%s4] sm:$0x1]
      %v642 = vlaneseq
      %v643 = vshrl.u32 %v642, 7
      %v644 = vsub.s32 0, %v643
      %v645 = vrot.slane %v640, %v644
      %v647 = vadd.f32 %v639, %v645
      %v648 = vmax.f32 %v647, 0.0
      %vm649 = vcmask 125952
      %650 = vst.msk [vmem:[%s299] sm:$0xf] %vm649, %v648
      %p651 = scmp.lt.s32.totalorder %s20, 1
      %s652 = scalar_select %p651, %s20, 1
      %p653 = scmp.lt.s32.totalorder %s21, 3
      %s654 = scalar_select %p653, %s21, 3
      %s655 = smul.addr %s652, 4
      %s656 = sadd.s32 %s654, %s655
      %s657 = smul.addr %s656, 4
      %s658 = scalar_lea.vmem %s5, %s657
      // Predicated region
      $region41: #{backbone_base_forward.4} parent=39 // pred_check
        %p659 = pneg %p169
      $region42: #{backbone_base_forward.4} parent=39 // pred_check_branch
        %661 = sbr.rel (%p659) target = $region44
      $region43: #{backbone_base_forward.4} parent=39 // pred_region
        _
      $region44: #{backbone_base_forward.4} parent=39 // pred_fallthru
        _
    $region40: #{backbone_base_forward.4} parent=5 // pred_fallthru
      _
    %p662 = scmp.le.s32.totalorder 2, %s11
    // Predicated region
    $region45: #{backbone_base_forward.4} parent=5 // pred_check
      %p663 = pneg %p662
    $region46: #{backbone_base_forward.4} parent=5 // pred_check_branch
      %665 = sbr.rel (%p663) target = $region48
    $region47: #{backbone_base_forward.4} parent=5 // pred_region
      %s666 = ssub.s32 %s11, 2
      // Predicated region
      $region49: #{backbone_base_forward.4} parent=47 // pred_check
        %p667 = pneg %p175
      $region50: #{backbone_base_forward.4} parent=47 // pred_check_branch
        %669 = sbr.rel (%p667) target = $region52
      $region51: #{backbone_base_forward.4} parent=47 // pred_region
        %p670 = scmp.lt.s32.totalorder %s22, 1
        %s671 = scalar_select %p670, %s22, 1
        %p672 = scmp.lt.s32.totalorder %s23, 3
        %s673 = scalar_select %p672, %s23, 3
        %s674 = smul.addr %s671, 4
        %s675 = sadd.s32 %s673, %s674
        %s676 = smul.addr %s675, 4
        %s677 = scalar_lea.vmem %s5, %s676
      $region52: #{backbone_base_forward.4} parent=47 // pred_fallthru
        _
    $region48: #{backbone_base_forward.4} parent=5 // pred_fallthru
      _
  $region6: #{backbone_base_forward.4} parent=0 // loop_footer
    %s15 = sadd.s32 1, %s11
  $region7: #{backbone_base_forward.4} parent=0 // loop_footer_branch
    %10 = sbr.rel target = $region3
  $region8: #{backbone_base_forward.4} parent=0 // loop_exit
    _

// kernel: backbone_base_forward.5
$region0: #{backbone_base_forward.5}
  #allocation0 [shape = 'u32[]', space=smem, size = 0x4, offset = 0x4, fixed_abs, tag = 'smem constant byte address 0x4 - core index']
  #allocation1 [shape = 'u32[144,128]{1,0:T(1,128)}', space=vmem, size = 0x12000, scoped, tag = 'internal scratch']
  %s0 = inlined_call_operand.vmem [shape: bf16[2,3,2,3,32], index: 0, kind: input, shape index: {}, may-alias: {0,1}]
  %s1 = inlined_call_operand.vmem [shape: bf16[2,3,2,3,32], index: 1, kind: input, shape index: {}, may-alias: {0,1}]
  %s2 = inlined_call_operand.vmem [shape: bf16[3,32,32], index: 2, kind: input, shape index: {}]
  %s3 = inlined_call_operand.vmem [shape: bf16[3,16,32], index: 3, kind: input, shape index: {}]
  %s4 = inlined_call_operand.vmem [shape: f32[1,32], index: 4, kind: input, shape index: {}]
  %s5 = inlined_call_operand.hbm [shape: f32[2,2,2,32], index: 5, kind: output, shape index: {}]
  %s6 = sld [smem:[#allocation0]]
  $region53: #{backbone_base_forward.5} parent=0
    _
  %s8 = ssub.s32 1, %s6
  %s9 = scalar_select 0, %s8, %s6
  $region1: #{backbone_base_forward.5} parent=0
    #allocation2 [shape = 'u8[2048]{0}', space=vmem, size = 0x800, scoped, tag = 'output window, operand 0']
    #allocation3 [shape = 's32[2]{0}', space=sflag, size = 0x8, scoped, tag = 'scoped memory for backbone_base_forward.5']
    %10 = vsyncpa [#allocation3], 0
    %s11 = scalar_lea.sflag [#allocation3], 1
    %12 = vsyncpa %s11, 0
    loop: start=0, step=1, limit=6
    $region2: #{backbone_base_forward.5} parent=1 // loop_pre_header
      _
    $region3: #{backbone_base_forward.5} parent=1 // loop_header
      %s14 = sphi 0, %s18
      %p15 = scmp.ge.s32.totalorder %s14, 6
      %s21 = sphi 0, %s33
      %s22 = sphi 0, %s29
      %s23 = sphi 0, %s21
      %s24 = sphi 0, %s22
      %s25 = sphi 0, %s23
      %s26 = sphi 0, %s24
      %s38 = sphi 0, %s40
      %s41 = sphi 0, %s38
      %s42 = sphi 0, %s41
      %s58 = sphi 0, %s42
      %s68 = sphi 0, %s70
      %s71 = sphi 0, %s68
      %s72 = sphi 0, %s71
      %s88 = sphi 0, %s72
      %s92 = sphi 0, %s92
      %s94 = sphi 0, %s92
      %s95 = sphi 0, %s94
      %s109 = sphi 0, %s95
      %s113 = sphi 0, %s113
      %s115 = sphi 0, %s113
      %s116 = sphi 0, %s115
      %s130 = sphi 0, %s116
      %s134 = sphi 0, %s134
      %s136 = sphi 0, %s134
      %s137 = sphi 0, %s136
      %s151 = sphi 0, %s137
      %s159 = sphi 0, %s161
      %s162 = sphi 0, %s159
      %s163 = sphi 0, %s162
      %s179 = sphi 0, %s163
    $region4: #{backbone_base_forward.5} parent=1 // loop_header_branch
      %17 = sbr.rel (%p15) target = $region8
    $region5: #{backbone_base_forward.5} parent=1 // loop_body
      %s19 = ssub.s32 %s14, 1
      %s20 = ssub.s32 %s14, 2
      %s27 = sadd.s32 1, %s22
      %p28 = scmp.ge.s32.totalorder %s27, 2
      %s29 = scalar_select %p28, 0, %s27
      %s30 = sadd.s32 1, %s21
      %s31 = scalar_select %p28, %s30, %s21
      %p32 = scmp.ge.s32.totalorder %s31, 2
      %s33 = scalar_select %p32, 0, %s31
      %s34 = ssub.s32 %s21, %s33
      %s35 = ssub.s32 %s22, %s29
      %s36 = sor.u32 %s34, %s35
      %p37 = scmp.eq.s32.totalorder %s36, 0
      %s39 = sadd.s32 %s38, 1
      %s40 = scalar_select %p37, %s38, %s39
      %p43 = pneg %p37
      %p44 = scmp.eq.s32.totalorder %s14, 3
      %p45 = por %p43, %p44
      %p46 = scmp.ne.s32.totalorder %s38, %s41
      %p47 = scmp.eq.s32.totalorder %s14, 0
      %p48 = por %p46, %p47
      %p49 = scmp.ne.s32.totalorder %s38, %s41
      %p50 = scmp.eq.s32.totalorder %s19, 3
      %p51 = por %p49, %p50
      %p52 = scmp.ne.s32.totalorder %s41, %s42
      %p53 = scmp.eq.s32.totalorder %s19, 0
      %p54 = por %p52, %p53
      %p55 = scmp.ne.s32.totalorder %s41, %s42
      %p56 = scmp.eq.s32.totalorder %s20, 3
      %p57 = por %p55, %p56
      %p59 = scmp.ne.s32.totalorder %s42, %s58
      %p60 = scmp.eq.s32.totalorder %s20, 0
      %p61 = por %p59, %p60
      %s62 = sadd.s32 %s22, 1
      %s63 = sadd.s32 %s29, 1
      %s64 = ssub.s32 %s21, %s33
      %s65 = ssub.s32 %s62, %s63
      %s66 = sor.u32 %s64, %s65
      %p67 = scmp.eq.s32.totalorder %s66, 0
      %s69 = sadd.s32 %s68, 1
      %s70 = scalar_select %p67, %s68, %s69
      %p73 = pneg %p67
      %p74 = scmp.eq.s32.totalorder %s14, 3
      %p75 = por %p73, %p74
      %p76 = scmp.ne.s32.totalorder %s68, %s71
      %p77 = scmp.eq.s32.totalorder %s14, 0
      %p78 = por %p76, %p77
      %p79 = scmp.ne.s32.totalorder %s68, %s71
      %p80 = scmp.eq.s32.totalorder %s19, 3
      %p81 = por %p79, %p80
      %p82 = scmp.ne.s32.totalorder %s71, %s72
      %p83 = scmp.eq.s32.totalorder %s19, 0
      %p84 = por %p82, %p83
      %p85 = scmp.ne.s32.totalorder %s71, %s72
      %p86 = scmp.eq.s32.totalorder %s20, 3
      %p87 = por %p85, %p86
      %p89 = scmp.ne.s32.totalorder %s72, %s88
      %p90 = scmp.eq.s32.totalorder %s20, 0
      %p91 = por %p89, %p90
      %s93 = sadd.s32 %s92, 1
      %p96 = scmp.eq.s32.totalorder %s14, 3
      %p97 = scmp.ne.s32.totalorder %s92, %s94
      %p98 = scmp.eq.s32.totalorder %s14, 0
      %p99 = por %p97, %p98
      %p100 = scmp.ne.s32.totalorder %s92, %s94
      %p101 = scmp.eq.s32.totalorder %s19, 3
      %p102 = por %p100, %p101
      %p103 = scmp.ne.s32.totalorder %s94, %s95
      %p104 = scmp.eq.s32.totalorder %s19, 0
      %p105 = por %p103, %p104
      %p106 = scmp.ne.s32.totalorder %s94, %s95
      %p107 = scmp.eq.s32.totalorder %s20, 3
      %p108 = por %p106, %p107
      %p110 = scmp.ne.s32.totalorder %s95, %s109
      %p111 = scmp.eq.s32.totalorder %s20, 0
      %p112 = por %p110, %p111
      %s114 = sadd.s32 %s113, 1
      %p117 = scmp.eq.s32.totalorder %s14, 3
      %p118 = scmp.ne.s32.totalorder %s113, %s115
      %p119 = scmp.eq.s32.totalorder %s14, 0
      %p120 = por %p118, %p119
      %p121 = scmp.ne.s32.totalorder %s113, %s115
      %p122 = scmp.eq.s32.totalorder %s19, 3
      %p123 = por %p121, %p122
      %p124 = scmp.ne.s32.totalorder %s115, %s116
      %p125 = scmp.eq.s32.totalorder %s19, 0
      %p126 = por %p124, %p125
      %p127 = scmp.ne.s32.totalorder %s115, %s116
      %p128 = scmp.eq.s32.totalorder %s20, 3
      %p129 = por %p127, %p128
      %p131 = scmp.ne.s32.totalorder %s116, %s130
      %p132 = scmp.eq.s32.totalorder %s20, 0
      %p133 = por %p131, %p132
      %s135 = sadd.s32 %s134, 1
      %p138 = scmp.eq.s32.totalorder %s14, 3
      %p139 = scmp.ne.s32.totalorder %s134, %s136
      %p140 = scmp.eq.s32.totalorder %s14, 0
      %p141 = por %p139, %p140
      %p142 = scmp.ne.s32.totalorder %s134, %s136
      %p143 = scmp.eq.s32.totalorder %s19, 3
      %p144 = por %p142, %p143
      %p145 = scmp.ne.s32.totalorder %s136, %s137
      %p146 = scmp.eq.s32.totalorder %s19, 0
      %p147 = por %p145, %p146
      %p148 = scmp.ne.s32.totalorder %s136, %s137
      %p149 = scmp.eq.s32.totalorder %s20, 3
      %p150 = por %p148, %p149
      %p152 = scmp.ne.s32.totalorder %s137, %s151
      %p153 = scmp.eq.s32.totalorder %s20, 0
      %p154 = por %p152, %p153
      %s155 = ssub.s32 %s21, %s33
      %s156 = ssub.s32 %s22, %s29
      %s157 = sor.u32 %s155, %s156
      %p158 = scmp.eq.s32.totalorder %s157, 0
      %s160 = sadd.s32 %s159, 1
      %s161 = scalar_select %p158, %s159, %s160
      %p164 = pneg %p158
      %p165 = scmp.eq.s32.totalorder %s14, 3
      %p166 = por %p164, %p165
      %p167 = scmp.ne.s32.totalorder %s159, %s162
      %p168 = scmp.eq.s32.totalorder %s14, 0
      %p169 = por %p167, %p168
      %p170 = scmp.ne.s32.totalorder %s159, %s162
      %p171 = scmp.eq.s32.totalorder %s19, 3
      %p172 = por %p170, %p171
      %p173 = scmp.ne.s32.totalorder %s162, %s163
      %p174 = scmp.eq.s32.totalorder %s19, 0
      %p175 = por %p173, %p174
      %p176 = scmp.ne.s32.totalorder %s162, %s163
      %p177 = scmp.eq.s32.totalorder %s20, 3
      %p178 = por %p176, %p177
      %p180 = scmp.ne.s32.totalorder %s163, %s179
      %p181 = scmp.eq.s32.totalorder %s20, 0
      %p182 = por %p180, %p181
      %p183 = scmp.le.s32.totalorder 1, %s14
      %p184 = scmp.lt.s32.totalorder %s14, 5
      %p185 = pnand %p183, %p184
      %p186 = pneg %p185
      // Predicated region
      $region9: #{backbone_base_forward.5} parent=5 // pred_check
        _
      $region10: #{backbone_base_forward.5} parent=5 // pred_check_branch
        %188 = sbr.rel (%p185) target = $region12
      $region11: #{backbone_base_forward.5} parent=5 // pred_region
        %s189 = ssub.s32 %s14, 1
        // Predicated region
        $region13: #{backbone_base_forward.5} parent=11 // pred_check
          %p190 = pneg %p105
        $region14: #{backbone_base_forward.5} parent=11 // pred_check_branch
          %192 = sbr.rel (%p190) target = $region16
        $region15: #{backbone_base_forward.5} parent=11 // pred_region
          _
        $region16: #{backbone_base_forward.5} parent=11 // pred_fallthru
          _
        // Predicated region
        $region17: #{backbone_base_forward.5} parent=11 // pred_check
          %p193 = pneg %p126
        $region18: #{backbone_base_forward.5} parent=11 // pred_check_branch
          %195 = sbr.rel (%p193) target = $region20
        $region19: #{backbone_base_forward.5} parent=11 // pred_region
          _
        $region20: #{backbone_base_forward.5} parent=11 // pred_fallthru
          _
        // Predicated region
        $region21: #{backbone_base_forward.5} parent=11 // pred_check
          %p196 = pneg %p147
        $region22: #{backbone_base_forward.5} parent=11 // pred_check_branch
          %198 = sbr.rel (%p196) target = $region24
        $region23: #{backbone_base_forward.5} parent=11 // pred_region
          _
        $region24: #{backbone_base_forward.5} parent=11 // pred_fallthru
          _
      $region12: #{backbone_base_forward.5} parent=5 // pred_fallthru
        _
      %p199 = scmp.lt.s32.totalorder %s14, 4
      // Predicated region
      $region25: #{backbone_base_forward.5} parent=5 // pred_check
        %p200 = pneg %p199
      $region26: #{backbone_base_forward.5} parent=5 // pred_check_branch
        %202 = sbr.rel (%p200) target = $region28
      $region27: #{backbone_base_forward.5} parent=5 // pred_region
        // Predicated region
        $region29: #{backbone_base_forward.5} parent=27 // pred_check
          %p203 = pneg %p48
        $region30: #{backbone_base_forward.5} parent=27 // pred_check_branch
          %205 = sbr.rel (%p203) target = $region32
        $region31: #{backbone_base_forward.5} parent=27 // pred_region
          %p206 = scmp.lt.s32.totalorder %s21, 1
          %s207 = scalar_select %p206, %s21, 1
          %p208 = scmp.lt.s32.totalorder %s22, 2
          %s209 = scalar_select %p208, %s22, 2
          %s210 = smul.addr %s209, 2
          %s211 = smul.addr %s207, 6
          %s212 = sadd.s32 %s210, %s211
          %s213 = smul.addr %s212, 2
          %s214 = scalar_lea.vmem %s0, %s213
        $region32: #{backbone_base_forward.5} parent=27 // pred_fallthru
          _
        // Predicated region
        $region33: #{backbone_base_forward.5} parent=27 // pred_check
          %p215 = pneg %p78
        $region34: #{backbone_base_forward.5} parent=27 // pred_check_branch
          %217 = sbr.rel (%p215) target = $region36
        $region35: #{backbone_base_forward.5} parent=27 // pred_region
          %s218 = sadd.s32 %s22, 1
          %p219 = scmp.lt.s32.totalorder %s21, 1
          %s220 = scalar_select %p219, %s21, 1
          %p221 = scmp.lt.s32.totalorder %s218, 2
          %s222 = scalar_select %p221, %s218, 2
          %s223 = smul.addr %s222, 2
          %s224 = smul.addr %s220, 6
          %s225 = sadd.s32 %s223, %s224
          %s226 = smul.addr %s225, 2
          %s227 = scalar_lea.vmem %s1, %s226
          %s228 = sadd.s32 %s22, 1
        $region36: #{backbone_base_forward.5} parent=27 // pred_fallthru
          _
      $region28: #{backbone_base_forward.5} parent=5 // pred_fallthru
        _
      %p229 = scmp.le.s32.totalorder 1, %s14
      %p230 = scmp.lt.s32.totalorder %s14, 5
      %p231 = pnand %p229, %p230
      %p232 = pneg %p231
      // Predicated region
      $region37: #{backbone_base_forward.5} parent=5 // pred_check
        _
      $region38: #{backbone_base_forward.5} parent=5 // pred_check_branch
        %234 = sbr.rel (%p231) target = $region40
      $region39: #{backbone_base_forward.5} parent=5 // pred_region
        %s235 = ssub.s32 %s14, 1
        %p236 = scmp.lt.s32.totalorder %s23, 1
        %s237 = scalar_select %p236, %s23, 1
        %p238 = scmp.lt.s32.totalorder %s24, 2
        %s239 = scalar_select %p238, %s24, 2
        %s240 = smul.addr %s239, 2
        %s241 = smul.addr %s237, 6
        %s242 = sadd.s32 %s240, %s241
        %s243 = smul.addr %s242, 2
        %s244 = scalar_lea.vmem %s0, %s243
        %p245 = pneg %p54
        %p246 = pneg %p51
        %s247 = sadd.s32 %s24, 1
        %p248 = scmp.lt.s32.totalorder %s23, 1
        %s249 = scalar_select %p248, %s23, 1
        %p250 = scmp.lt.s32.totalorder %s247, 2
        %s251 = scalar_select %p250, %s247, 2
        %s252 = smul.addr %s251, 2
        %s253 = smul.addr %s249, 6
        %s254 = sadd.s32 %s252, %s253
        %s255 = smul.addr %s254, 2
        %s256 = scalar_lea.vmem %s1, %s255
        %p257 = pneg %p84
        %p258 = pneg %p81
        %p259 = pneg %p105
        %p260 = pneg %p102
        %p261 = pneg %p126
        %p262 = pneg %p123
        %p263 = pneg %p147
        %p264 = pneg %p144
        %p265 = pneg %p175
        %p266 = pneg %p172
        %s267 = sand.u32 %s162, 1
        %s268 = scalar_lea.sflag [#allocation3], %s267
        %s269 = sand.u32 %s162, 1
        %s270 = smul.addr %s269, 2
        %s271 = scalar_lea.vmem [#allocation2], %s270
        %p272 = scmp.lt.s32.totalorder %s23, 1
        %s273 = scalar_select %p272, %s23, 1
        %p274 = scmp.lt.s32.totalorder %s24, 2
        %s275 = scalar_select %p274, %s24, 2
        %s276 = smul.addr %s275, 2
        %s277 = smul.addr %s273, 6
        %s278 = sadd.s32 %s276, %s277
        %s279 = smul.addr %s278, 2
        %s280 = scalar_lea.vmem %s0, %s279
        %s281 = sadd.s32 %s24, 1
        %p282 = scmp.lt.s32.totalorder %s23, 1
        %s283 = scalar_select %p282, %s23, 1
        %p284 = scmp.lt.s32.totalorder %s281, 2
        %s285 = scalar_select %p284, %s281, 2
        %s286 = smul.addr %s285, 2
        %s287 = smul.addr %s283, 6
        %s288 = sadd.s32 %s286, %s287
        %s289 = smul.addr %s288, 2
        %s290 = scalar_lea.vmem %s1, %s289
        %s291 = sadd.s32 %s24, 1
        %v293 = vld [vmem:[%s280] sm:$0x3]
        %s294 = scalar_lea.vmem %s280, 2
        %v295 = vld [vmem:[%s294] sm:$0x3]
        %v296 = vld [vmem:[%s290] sm:$0x3]
        %v297 = vld [vmem:[%s2] sm:$0xf]
        %v298 = vld [vmem:[%s2 + $0x4] sm:$0xf]
        %v299 = vld [vmem:[%s2 + $0x8] sm:$0xf]
        %v300 = vld [vmem:[%s2 + $0xc] sm:$0xf]
        %v301 = vld [vmem:[%s3] sm:$0xf]
        %v302 = vld [vmem:[%s3 + $0x4] sm:$0xf]
        %v305 = vunpack.c.l.s4 1983009808
        %v306 = vunpack.c.0.s8 %v305
        %v307 = vlaneseq
        %v308 = vshrl.u32 %v307, 7
        %v309 = vsub.s32 %v306, %v308
        %v310 = vrot.slane %v293, %v309
        %v312 = vshrl.u32 %v310, 16
        %v314 = vshll.u32 %v310, 16
        %v316 = vrot.slane %v314, 1
        %v317 = vor.u32 %v312, %v316
        %v320 = vunpack.c.l.b16 %v301
        %v321 = vunpack.c.l.b16 %v302
        %v322 = vpack.c.b16 %v321, %v320
        %vm324 = vcmask 130048
        %v326 = vsel %vm324, %v317, 0
        %328 = vmatprep.subr.bf16.mxu0 0
        %329 = vmatpush1.bf16.msra.mxu0 %v322
        %330 = vmatprep.subr.bf16.mxu0 0
        %331 = vmatpush1.bf16.msra.mxu0 0
        %332 = vmatprep.subr.bf16.mxu0 0
        %333 = vmatpush1.bf16.msra.mxu0 0
        %334 = vmatprep.subr.bf16.mxu0 0
        %335 = vmatpush1.bf16.msra.mxu0 0
        %336 = vmatprep.subr.bf16.mxu0 0
        %337 = vmatpush1.bf16.msra.mxu0 0
        %338 = vmatprep.subr.bf16.mxu0 0
        %339 = vmatpush1.bf16.msra.mxu0 0
        %340 = vmatprep.subr.bf16.mxu0 0
        %341 = vmatpush1.bf16.msra.mxu0 0
        %342 = vmatprep.subr.bf16.mxu0 0
        %343 = vmatpush1.bf16.msra.mxu0 0
        %344 = vmatprep.subr.bf16.mxu0 0
        %345 = vmatpush1.bf16.msra.mxu0 0
        %346 = vmatprep.subr.bf16.mxu0 0
        %347 = vmatpush1.bf16.msra.mxu0 0
        %348 = vmatprep.subr.bf16.mxu0 0
        %349 = vmatpush1.bf16.msra.mxu0 0
        %350 = vmatprep.subr.bf16.mxu0 0
        %351 = vmatpush1.bf16.msra.mxu0 0
        %352 = vmatprep.subr.bf16.mxu0 0
        %353 = vmatpush1.bf16.msra.mxu0 0
        %354 = vmatprep.subr.bf16.mxu0 0
        %355 = vmatpush1.bf16.msra.mxu0 0
        %356 = vmatprep.subr.bf16.mxu0 0
        %357 = vmatpush1.bf16.msra.mxu0 0
        %358 = vmatprep.subr.bf16.mxu0 0
        %359 = vmatpush1.bf16.msra.mxu0 0
        %360 = vmatprep.mubr.bf16.mxu0 0
        %361 = vmatmul.mubr.bf16.gmra.mrb[0].mxu0 %v326
        %v362 = vpop.f32.mrb[0].mxu0
        %v363 = vadd.f32 0.0, %v362
        %v364 = vpop.f32.mrb[0].mxu0
        %v365 = vpop.f32.mrb[0].mxu0
        %v366 = vpop.f32.mrb[0].mxu0
        %367 = vdwg.mxu0
        %v372 = vunpack.c.l.b16 %v297
        %v373 = vunpack.c.l.b16 %v298
        %v374 = vunpack.c.l.b16 %v299
        %v375 = vunpack.c.l.b16 %v300
        %v376 = vpack.c.b16 %v373, %v372
        %v377 = vpack.c.b16 %v375, %v374
        %vm380 = vcmask 261120
        %v382 = vsel %vm380, %v293, 0
        %384 = vmatprep.subr.bf16.mxu0 0
        %385 = vmatpush1.bf16.msra.mxu0 %v376
        %386 = vmatprep.subr.bf16.mxu0 0
        %387 = vmatpush1.bf16.msra.mxu0 %v377
        %388 = vmatprep.subr.bf16.mxu0 0
        %389 = vmatpush1.bf16.msra.mxu0 0
        %390 = vmatprep.subr.bf16.mxu0 0
        %391 = vmatpush1.bf16.msra.mxu0 0
        %392 = vmatprep.subr.bf16.mxu0 0
        %393 = vmatpush1.bf16.msra.mxu0 0
        %394 = vmatprep.subr.bf16.mxu0 0
        %395 = vmatpush1.bf16.msra.mxu0 0
        %396 = vmatprep.subr.bf16.mxu0 0
        %397 = vmatpush1.bf16.msra.mxu0 0
        %398 = vmatprep.subr.bf16.mxu0 0
        %399 = vmatpush1.bf16.msra.mxu0 0
        %400 = vmatprep.subr.bf16.mxu0 0
        %401 = vmatpush1.bf16.msra.mxu0 0
        %402 = vmatprep.subr.bf16.mxu0 0
        %403 = vmatpush1.bf16.msra.mxu0 0
        %404 = vmatprep.subr.bf16.mxu0 0
        %405 = vmatpush1.bf16.msra.mxu0 0
        %406 = vmatprep.subr.bf16.mxu0 0
        %407 = vmatpush1.bf16.msra.mxu0 0
        %408 = vmatprep.subr.bf16.mxu0 0
        %409 = vmatpush1.bf16.msra.mxu0 0
        %410 = vmatprep.subr.bf16.mxu0 0
        %411 = vmatpush1.bf16.msra.mxu0 0
        %412 = vmatprep.subr.bf16.mxu0 0
        %413 = vmatpush1.bf16.msra.mxu0 0
        %414 = vmatprep.subr.bf16.mxu0 0
        %415 = vmatpush1.bf16.msra.mxu0 0
        %416 = vmatprep.mubr.bf16.mxu0 0
        %417 = vmatmul.mubr.bf16.gmra.mrb[0].mxu0 %v382
        %v418 = vpop.f32.mrb[0].mxu0
        %v419 = vadd.f32 %v363, %v418
        %v420 = vpop.f32.mrb[0].mxu0
        %v421 = vpop.f32.mrb[0].mxu0
        %v422 = vpop.f32.mrb[0].mxu0
        %423 = vdwg.mxu0
        %s424 = scalar_lea.vmem %s2, 16
        %v425 = vld [vmem:[%s424] sm:$0xf]
        %v426 = vld [vmem:[%s424 + $0x4] sm:$0xf]
        %v427 = vld [vmem:[%s424 + $0x8] sm:$0xf]
        %v428 = vld [vmem:[%s424 + $0xc] sm:$0xf]
        %v433 = vunpack.c.l.b16 %v425
        %v434 = vunpack.c.l.b16 %v426
        %v435 = vunpack.c.l.b16 %v427
        %v436 = vunpack.c.l.b16 %v428
        %v437 = vpack.c.b16 %v434, %v433
        %v438 = vpack.c.b16 %v436, %v435
        %v442 = vsel %vm380, %v295, 0
        %444 = vmatprep.subr.bf16.mxu0 0
        %445 = vmatpush1.bf16.msra.mxu0 %v437
        %446 = vmatprep.subr.bf16.mxu0 0
        %447 = vmatpush1.bf16.msra.mxu0 %v438
        %448 = vmatprep.subr.bf16.mxu0 0
        %449 = vmatpush1.bf16.msra.mxu0 0
        %450 = vmatprep.subr.bf16.mxu0 0
        %451 = vmatpush1.bf16.msra.mxu0 0
        %452 = vmatprep.subr.bf16.mxu0 0
        %453 = vmatpush1.bf16.msra.mxu0 0
        %454 = vmatprep.subr.bf16.mxu0 0
        %455 = vmatpush1.bf16.msra.mxu0 0
        %456 = vmatprep.subr.bf16.mxu0 0
        %457 = vmatpush1.bf16.msra.mxu0 0
        %458 = vmatprep.subr.bf16.mxu0 0
        %459 = vmatpush1.bf16.msra.mxu0 0
        %460 = vmatprep.subr.bf16.mxu0 0
        %461 = vmatpush1.bf16.msra.mxu0 0
        %462 = vmatprep.subr.bf16.mxu0 0
        %463 = vmatpush1.bf16.msra.mxu0 0
        %464 = vmatprep.subr.bf16.mxu0 0
        %465 = vmatpush1.bf16.msra.mxu0 0
        %466 = vmatprep.subr.bf16.mxu0 0
        %467 = vmatpush1.bf16.msra.mxu0 0
        %468 = vmatprep.subr.bf16.mxu0 0
        %469 = vmatpush1.bf16.msra.mxu0 0
        %470 = vmatprep.subr.bf16.mxu0 0
        %471 = vmatpush1.bf16.msra.mxu0 0
        %472 = vmatprep.subr.bf16.mxu0 0
        %473 = vmatpush1.bf16.msra.mxu0 0
        %474 = vmatprep.subr.bf16.mxu0 0
        %475 = vmatpush1.bf16.msra.mxu0 0
        %476 = vmatprep.mubr.bf16.mxu0 0
        %477 = vmatmul.mubr.bf16.gmra.mrb[0].mxu0 %v442
        %v478 = vpop.f32.mrb[0].mxu0
        %v479 = vadd.f32 0.0, %v478
        %v480 = vpop.f32.mrb[0].mxu0
        %v481 = vpop.f32.mrb[0].mxu0
        %v482 = vpop.f32.mrb[0].mxu0
        %483 = vdwg.mxu0
        %v484 = vadd.f32 %v419, %v479
        %s485 = scalar_lea.vmem %s3, 8
        %v486 = vld [vmem:[%s485] sm:$0xf]
        %v487 = vld [vmem:[%s485 + $0x4] sm:$0xf]
        %v490 = vunpack.c.l.s4 1983009808
        %v491 = vunpack.c.0.s8 %v490
        %v492 = vlaneseq
        %v493 = vshrl.u32 %v492, 7
        %v494 = vsub.s32 %v491, %v493
        %v495 = vrot.slane %v295, %v494
        %v497 = vshrl.u32 %v495, 16
        %v499 = vshll.u32 %v495, 16
        %v501 = vrot.slane %v499, 1
        %v502 = vor.u32 %v497, %v501
        %v505 = vunpack.c.l.b16 %v486
        %v506 = vunpack.c.l.b16 %v487
        %v507 = vpack.c.b16 %v506, %v505
        %v510 = vsel %vm324, %v502, 0
        %512 = vmatprep.subr.bf16.mxu0 0
        %513 = vmatpush1.bf16.msra.mxu0 %v507
        %514 = vmatprep.subr.bf16.mxu0 0
        %515 = vmatpush1.bf16.msra.mxu0 0
        %516 = vmatprep.subr.bf16.mxu0 0
        %517 = vmatpush1.bf16.msra.mxu0 0
        %518 = vmatprep.subr.bf16.mxu0 0
        %519 = vmatpush1.bf16.msra.mxu0 0
        %520 = vmatprep.subr.bf16.mxu0 0
        %521 = vmatpush1.bf16.msra.mxu0 0
        %522 = vmatprep.subr.bf16.mxu0 0
        %523 = vmatpush1.bf16.msra.mxu0 0
        %524 = vmatprep.subr.bf16.mxu0 0
        %525 = vmatpush1.bf16.msra.mxu0 0
        %526 = vmatprep.subr.bf16.mxu0 0
        %527 = vmatpush1.bf16.msra.mxu0 0
        %528 = vmatprep.subr.bf16.mxu0 0
        %529 = vmatpush1.bf16.msra.mxu0 0
        %530 = vmatprep.subr.bf16.mxu0 0
        %531 = vmatpush1.bf16.msra.mxu0 0
        %532 = vmatprep.subr.bf16.mxu0 0
        %533 = vmatpush1.bf16.msra.mxu0 0
        %534 = vmatprep.subr.bf16.mxu0 0
        %535 = vmatpush1.bf16.msra.mxu0 0
        %536 = vmatprep.subr.bf16.mxu0 0
        %537 = vmatpush1.bf16.msra.mxu0 0
        %538 = vmatprep.subr.bf16.mxu0 0
        %539 = vmatpush1.bf16.msra.mxu0 0
        %540 = vmatprep.subr.bf16.mxu0 0
        %541 = vmatpush1.bf16.msra.mxu0 0
        %542 = vmatprep.subr.bf16.mxu0 0
        %543 = vmatpush1.bf16.msra.mxu0 0
        %544 = vmatprep.mubr.bf16.mxu0 0
        %545 = vmatmul.mubr.bf16.gmra.mrb[0].mxu0 %v510
        %v546 = vpop.f32.mrb[0].mxu0
        %v547 = vadd.f32 0.0, %v546
        %v548 = vpop.f32.mrb[0].mxu0
        %v549 = vpop.f32.mrb[0].mxu0
        %v550 = vpop.f32.mrb[0].mxu0
        %551 = vdwg.mxu0
        %v552 = vadd.f32 %v484, %v547
        %s553 = scalar_lea.vmem %s2, 32
        %v554 = vld [vmem:[%s553] sm:$0xf]
        %v555 = vld [vmem:[%s553 + $0x4] sm:$0xf]
        %v556 = vld [vmem:[%s553 + $0x8] sm:$0xf]
        %v557 = vld [vmem:[%s553 + $0xc] sm:$0xf]
        %v562 = vunpack.c.l.b16 %v554
        %v563 = vunpack.c.l.b16 %v555
        %v564 = vunpack.c.l.b16 %v556
        %v565 = vunpack.c.l.b16 %v557
        %v566 = vpack.c.b16 %v563, %v562
        %v567 = vpack.c.b16 %v565, %v564
        %v571 = vsel %vm380, %v296, 0
        %573 = vmatprep.subr.bf16.mxu0 0
        %574 = vmatpush1.bf16.msra.mxu0 %v566
        %575 = vmatprep.subr.bf16.mxu0 0
        %576 = vmatpush1.bf16.msra.mxu0 %v567
        %577 = vmatprep.subr.bf16.mxu0 0
        %578 = vmatpush1.bf16.msra.mxu0 0
        %579 = vmatprep.subr.bf16.mxu0 0
        %580 = vmatpush1.bf16.msra.mxu0 0
        %581 = vmatprep.subr.bf16.mxu0 0
        %582 = vmatpush1.bf16.msra.mxu0 0
        %583 = vmatprep.subr.bf16.mxu0 0
        %584 = vmatpush1.bf16.msra.mxu0 0
        %585 = vmatprep.subr.bf16.mxu0 0
        %586 = vmatpush1.bf16.msra.mxu0 0
        %587 = vmatprep.subr.bf16.mxu0 0
        %588 = vmatpush1.bf16.msra.mxu0 0
        %589 = vmatprep.subr.bf16.mxu0 0
        %590 = vmatpush1.bf16.msra.mxu0 0
        %591 = vmatprep.subr.bf16.mxu0 0
        %592 = vmatpush1.bf16.msra.mxu0 0
        %593 = vmatprep.subr.bf16.mxu0 0
        %594 = vmatpush1.bf16.msra.mxu0 0
        %595 = vmatprep.subr.bf16.mxu0 0
        %596 = vmatpush1.bf16.msra.mxu0 0
        %597 = vmatprep.subr.bf16.mxu0 0
        %598 = vmatpush1.bf16.msra.mxu0 0
        %599 = vmatprep.subr.bf16.mxu0 0
        %600 = vmatpush1.bf16.msra.mxu0 0
        %601 = vmatprep.subr.bf16.mxu0 0
        %602 = vmatpush1.bf16.msra.mxu0 0
        %603 = vmatprep.subr.bf16.mxu0 0
        %604 = vmatpush1.bf16.msra.mxu0 0
        %605 = vmatprep.mubr.bf16.mxu0 0
        %606 = vmatmul.mubr.bf16.gmra.mrb[0].mxu0 %v571
        %v607 = vpop.f32.mrb[0].mxu0
        %v608 = vadd.f32 0.0, %v607
        %v609 = vpop.f32.mrb[0].mxu0
        %v610 = vpop.f32.mrb[0].mxu0
        %v611 = vpop.f32.mrb[0].mxu0
        %612 = vdwg.mxu0
        %v613 = vadd.f32 %v552, %v608
        %s614 = scalar_lea.vmem %s3, 16
        %v615 = vld [vmem:[%s614] sm:$0xf]
        %v616 = vld [vmem:[%s614 + $0x4] sm:$0xf]
        %v619 = vunpack.c.l.s4 1983009808
        %v620 = vunpack.c.0.s8 %v619
        %v621 = vlaneseq
        %v622 = vshrl.u32 %v621, 7
        %v623 = vsub.s32 %v620, %v622
        %v624 = vrot.slane %v296, %v623
        %v626 = vshrl.u32 %v624, 16
        %v628 = vshll.u32 %v624, 16
        %v630 = vrot.slane %v628, 1
        %v631 = vor.u32 %v626, %v630
        %v634 = vunpack.c.l.b16 %v615
        %v635 = vunpack.c.l.b16 %v616
        %v636 = vpack.c.b16 %v635, %v634
        %v639 = vsel %vm324, %v631, 0
        %641 = vmatprep.subr.bf16.mxu0 0
        %642 = vmatpush1.bf16.msra.mxu0 %v636
        %643 = vmatprep.subr.bf16.mxu0 0
        %644 = vmatpush1.bf16.msra.mxu0 0
        %645 = vmatprep.subr.bf16.mxu0 0
        %646 = vmatpush1.bf16.msra.mxu0 0
        %647 = vmatprep.subr.bf16.mxu0 0
        %648 = vmatpush1.bf16.msra.mxu0 0
        %649 = vmatprep.subr.bf16.mxu0 0
        %650 = vmatpush1.bf16.msra.mxu0 0
        %651 = vmatprep.subr.bf16.mxu0 0
        %652 = vmatpush1.bf16.msra.mxu0 0
        %653 = vmatprep.subr.bf16.mxu0 0
        %654 = vmatpush1.bf16.msra.mxu0 0
        %655 = vmatprep.subr.bf16.mxu0 0
        %656 = vmatpush1.bf16.msra.mxu0 0
        %657 = vmatprep.subr.bf16.mxu0 0
        %658 = vmatpush1.bf16.msra.mxu0 0
        %659 = vmatprep.subr.bf16.mxu0 0
        %660 = vmatpush1.bf16.msra.mxu0 0
        %661 = vmatprep.subr.bf16.mxu0 0
        %662 = vmatpush1.bf16.msra.mxu0 0
        %663 = vmatprep.subr.bf16.mxu0 0
        %664 = vmatpush1.bf16.msra.mxu0 0
        %665 = vmatprep.subr.bf16.mxu0 0
        %666 = vmatpush1.bf16.msra.mxu0 0
        %667 = vmatprep.subr.bf16.mxu0 0
        %668 = vmatpush1.bf16.msra.mxu0 0
        %669 = vmatprep.subr.bf16.mxu0 0
        %670 = vmatpush1.bf16.msra.mxu0 0
        %671 = vmatprep.subr.bf16.mxu0 0
        %672 = vmatpush1.bf16.msra.mxu0 0
        %673 = vmatprep.mubr.bf16.mxu0 0
        %674 = vmatmul.mubr.bf16.gmra.mrb[0].mxu0 %v639
        %v675 = vpop.f32.mrb[0].mxu0
        %v676 = vadd.f32 0.0, %v675
        %v677 = vpop.f32.mrb[0].mxu0
        %v678 = vpop.f32.mrb[0].mxu0
        %v679 = vpop.f32.mrb[0].mxu0
        %680 = vdwg.mxu0
        %v681 = vadd.f32 %v613, %v676
        %v682 = vld [vmem:[%s4] sm:$0x1]
        %v684 = vlaneseq
        %v685 = vshrl.u32 %v684, 7
        %v686 = vsub.s32 0, %v685
        %v687 = vrot.slane %v682, %v686
        %v689 = vadd.f32 %v681, %v687
        %v690 = vmax.f32 %v689, 0.0
        %vm691 = vcmask 254976
        %692 = vst.msk [vmem:[%s271] sm:$0x3] %vm691, %v690
        %s693 = sand.u32 %s162, 1
        %s694 = scalar_lea.sflag [#allocation3], %s693
        %s695 = sand.u32 %s162, 1
        %s696 = smul.addr %s695, 2
        %s697 = scalar_lea.vmem [#allocation2], %s696
        // Predicated region
        $region41: #{backbone_base_forward.5} parent=39 // pred_check
          %p698 = pneg %p172
        $region42: #{backbone_base_forward.5} parent=39 // pred_check_branch
          %700 = sbr.rel (%p698) target = $region44
        $region43: #{backbone_base_forward.5} parent=39 // pred_region
          %s702 = ssub.s32 32, 32
          %703 = vsyncadd %s694, %s702
          %s704 = smul.addr %s23, 2
          %s705 = sadd.s32 %s24, %s704
          %s706 = smul.addr %s705, 32
          %s707 = scalar_lea.hbm %s5, %s706
          %s709 = sshll.u32 %s697, 4
          %s710 = int_to_ptr.vmem [resolvable:$true] %s709
          %712 = dma.vmem_to_hbm [thread:$0]  %s710, 32, %s707, %s694
        $region44: #{backbone_base_forward.5} parent=39 // pred_fallthru
          _
      $region40: #{backbone_base_forward.5} parent=5 // pred_fallthru
        _
      %p713 = scmp.le.s32.totalorder 2, %s14
      // Predicated region
      $region45: #{backbone_base_forward.5} parent=5 // pred_check
        %p714 = pneg %p713
      $region46: #{backbone_base_forward.5} parent=5 // pred_check_branch
        %716 = sbr.rel (%p714) target = $region48
      $region47: #{backbone_base_forward.5} parent=5 // pred_region
        %s717 = ssub.s32 %s14, 2
        // Predicated region
        $region49: #{backbone_base_forward.5} parent=47 // pred_check
          %p718 = pneg %p178
        $region50: #{backbone_base_forward.5} parent=47 // pred_check_branch
          %720 = sbr.rel (%p718) target = $region52
        $region51: #{backbone_base_forward.5} parent=47 // pred_region
          %s721 = sand.u32 %s163, 1
          %s722 = scalar_lea.sflag [#allocation3], %s721
          %s723 = sand.u32 %s163, 1
          %s724 = smul.addr %s723, 2
          %s725 = scalar_lea.vmem [#allocation2], %s724
          %726 = dma.done %s722, 32
        $region52: #{backbone_base_forward.5} parent=47 // pred_fallthru
          _
      $region48: #{backbone_base_forward.5} parent=5 // pred_fallthru
        _
    $region6: #{backbone_base_forward.5} parent=1 // loop_footer
      %s18 = sadd.s32 1, %s14
    $region7: #{backbone_base_forward.5} parent=1 // loop_footer_branch
      %13 = sbr.rel target = $region3
    $region8: #{backbone_base_forward.5} parent=1 // loop_exit
      _
    %727 = vsyncpa [#allocation3], 1
    %s728 = scalar_lea.sflag [#allocation3], 1
    %729 = vsyncpa %s728, 1

</llo_original>
